<compile_context>
chip_gen: v7x
topology: tpu7x:2x2x1
jax: 0.10.0
libtpu: 0.0.40
codegen_flags: <defaults>
</compile_context>

<pallas_src>
import functools

import jax
import jax.numpy as jnp
from jax.experimental import pallas as pl
from jax.experimental.pallas import tpu as pltpu


def _reward_kernel(x_ref,
                   w1_ref, b1_ref,
                   w2_ref, b2_ref,
                   w3_ref, b3_ref,
                   w4_ref, b4_ref,
                   w5_ref, b5_ref,
                   o_ref,
                   *, min_reward, max_reward):
    """Fused forward: 4x (Linear+ReLU) -> (mul + lane-reduce) -> clamp, lane-dense store."""
    # Layers 1..4: MXU matmuls with f32 accumulation; bias + ReLU in f32.
    h = jnp.dot(x_ref[...], w1_ref[...], preferred_element_type=jnp.float32)
    h = jnp.maximum(h + b1_ref[...], 0.0)

    h = jnp.dot(h.astype(w2_ref.dtype), w2_ref[...], preferred_element_type=jnp.float32)
    h = jnp.maximum(h + b2_ref[...], 0.0)

    h = jnp.dot(h.astype(w3_ref.dtype), w3_ref[...], preferred_element_type=jnp.float32)
    h = jnp.maximum(h + b3_ref[...], 0.0)

    h = jnp.dot(h.astype(w4_ref.dtype), w4_ref[...], preferred_element_type=jnp.float32)
    h = jnp.maximum(h + b4_ref[...], 0.0)

    # Layer 5 (out_features == 1): VPU multiply + cross-lane reduce instead of an N=1
    # MXU matmul.  w5_ref is a (1, H) f32 row; b5 is a scalar in SMEM.
    out = jnp.sum(h * w5_ref[...], axis=-1) + b5_ref[0, 0]          # (batch_tile,)
    out = jnp.clip(out, min_reward, max_reward)

    # Lane-dense store: batch maps to the lane axis of the (1, batch_tile) output block.
    o_ref[...] = out[None, :].astype(o_ref.dtype)


def _round_up(n, m):
    return -(-n // m) * m


def reward_model_forward(x, params, min_reward, max_reward, *,
                         batch_tile=None, cast_matmuls_to_bf16=True):
    """x: [B, state_dim] float32. Returns [B] float32 clamped reward."""
    B, S = x.shape
    H = params["w1"].shape[1]

    # --- choose batch tiling (lane-dense output wants 128-multiple tiles or a full block) ---
    if batch_tile is None:
        for cand in (512, 256, 128):
            if B % cand == 0:
                batch_tile = cand
                break
        else:
            batch_tile = 0                      # fall through to single full-batch block

    if batch_tile == 0 or batch_tile >= B:
        # Single full-batch block: any B works; pad rows to a sublane multiple.
        B_pad = max(8, _round_up(B, 8))
        batch_tile = B_pad
    else:
        assert batch_tile % 128 == 0, \
            "batch_tile must be a multiple of 128 when smaller than the batch"
        B_pad = _round_up(B, batch_tile)

    if B_pad != B:
        x = jnp.pad(x, ((0, B_pad - B), (0, 0)))
    num_tiles = B_pad // batch_tile

    # bf16 operands for the MXU (f32 accumulation stays) also halve the x-tile DMA bytes.
    # Biases, w5 and b5 stay f32: bias/ReLU/reduce/clip run in f32 on the VPU/XLU.
    mm = (lambda a: a.astype(jnp.bfloat16)) if cast_matmuls_to_bf16 else \
         (lambda a: a.astype(jnp.float32))
    x_in = mm(x)
    w1, w2, w3, w4 = (mm(params[k]) for k in ("w1", "w2", "w3", "w4"))
    b1, b2, b3, b4 = (params[k].astype(jnp.float32) for k in ("b1", "b2", "b3", "b4"))
    w5 = params["w5"].astype(jnp.float32)       # (1, H) row (PyTorch layout)
    b5 = params["b5"].astype(jnp.float32)       # (1, 1) scalar -> SMEM

    kernel = functools.partial(_reward_kernel,
                               min_reward=float(min_reward),
                               max_reward=float(max_reward))

    full = lambda i: (0, 0)   # weights/biases: same whole-array block every grid step
    args = (x_in, w1, b1, w2, b2, w3, b3, w4, b4, w5, b5)
    flops = 2 * B_pad * (S * H + 3 * H * H + H)
    bytes_accessed = sum(int(a.size) * a.dtype.itemsize for a in args) + B_pad * 4

    out = pl.pallas_call(
        kernel,
        out_shape=jax.ShapeDtypeStruct((1, B_pad), jnp.float32),
        grid_spec=pltpu.PrefetchScalarGridSpec(
            num_scalar_prefetch=0,
            grid=(num_tiles,),
            in_specs=[
                pl.BlockSpec((batch_tile, S), lambda i: (i, 0)),          # x tile (streams)
                pl.BlockSpec((S, H), full), pl.BlockSpec((1, H), full),   # fc1
                pl.BlockSpec((H, H), full), pl.BlockSpec((1, H), full),   # fc2
                pl.BlockSpec((H, H), full), pl.BlockSpec((1, H), full),   # fc3
                pl.BlockSpec((H, H), full), pl.BlockSpec((1, H), full),   # fc4
                pl.BlockSpec((1, H), full),                               # fc5 weight row
                pl.BlockSpec(memory_space=pltpu.MemorySpace.SMEM),        # fc5 bias scalar
            ],
            out_specs=pl.BlockSpec((1, batch_tile), lambda i: (0, i)),    # lane-dense output
        ),
        compiler_params=pltpu.CompilerParams(
            dimension_semantics=("parallel",)),
        cost_estimate=pl.CostEstimate(flops=flops, transcendentals=0,
                                      bytes_accessed=bytes_accessed),
    )(*args)

    return out[0, :B]   # (B,) -- matches .squeeze(-1)


def _orthogonal(key, out_features, in_features):
    """Deterministic orthogonal init matching nn.init.orthogonal_ semantics.

    Returns the [out_features, in_features] PyTorch-layout weight."""
    rows, cols = out_features, in_features
    flat = jax.random.normal(key, (max(rows, cols), min(rows, cols)), jnp.float32)
    q, r = jnp.linalg.qr(flat)
    q = q * jnp.sign(jnp.diagonal(r))
    if rows < cols:
        q = q.T
    return q[:rows, :cols]


def init_reward_model_params(key, state_dim, hidden_size):
    """Weights orthogonal (as in the module); biases uniform(-1/sqrt(fan_in), +)."""
    keys = jax.random.split(key, 10)
    dims = [(state_dim, hidden_size),
            (hidden_size, hidden_size),
            (hidden_size, hidden_size),
            (hidden_size, hidden_size),
            (hidden_size, 1)]
    params = {}
    for idx, (fan_in, fan_out) in enumerate(dims, start=1):
        w_pt = _orthogonal(keys[2 * (idx - 1)], fan_out, fan_in)      # [out, in]
        bound = 1.0 / jnp.sqrt(jnp.float32(fan_in))
        b = jax.random.uniform(keys[2 * (idx - 1) + 1], (1, fan_out),
                               jnp.float32, -bound, bound)
        if idx == 5:
            params["w5"] = jnp.asarray(w_pt, jnp.float32)             # keep (1, H) row
        else:
            params[f"w{idx}"] = jnp.asarray(w_pt.T, jnp.float32)      # store as [in, out]
        params[f"b{idx}"] = b
    return params


def _reference_forward(x, params, min_reward, max_reward):
    h = x
    for idx in range(1, 5):
        h = jnp.maximum(h @ params[f"w{idx}"] + params[f"b{idx}"], 0.0)
    out = (h @ params["w5"].T + params["b5"])[:, 0]
    return jnp.clip(out, min_reward, max_reward)


if __name__ == "__main__":
    key = jax.random.PRNGKey(0)
    k_param, k_x = jax.random.split(key)

    state_dim = 16
    hidden_size = 32
    batch = 256            # 2 grid steps of 128 rows: pipelined + megacore-shardable
    min_reward, max_reward = -1.0, 1.0

    params = init_reward_model_params(k_param, state_dim, hidden_size)
    x = jax.random.normal(k_x, (batch, state_dim), jnp.float32)

    ref = _reference_forward(x, params, min_reward, max_reward)

    # f32 matmul path: tight check against the reference.
    out_f32 = reward_model_forward(x, params, min_reward, max_reward,
                                   batch_tile=128, cast_matmuls_to_bf16=False)
    out_f32 = jax.block_until_ready(out_f32)
    assert out_f32.shape == (batch,)
    assert jnp.allclose(out_f32, ref, atol=1e-4, rtol=1e-4), (out_f32, ref)

    # Default bf16-operand path (cheaper DMA, MXU-native on all generations).
    out_bf16 = reward_model_forward(x, params, min_reward, max_reward, batch_tile=128)
    out_bf16 = jax.block_until_ready(out_bf16)
    assert out_bf16.shape == (batch,)
    assert jnp.allclose(out_bf16, ref, atol=5e-2, rtol=5e-2), (out_bf16, ref)

    # Tiny / ragged batch: exercises the padded single-block path.
    x_small = jax.random.normal(jax.random.PRNGKey(2), (2, state_dim), jnp.float32)
    ref_small = _reference_forward(x_small, params, min_reward, max_reward)
    out_small = reward_model_forward(x_small, params, min_reward, max_reward,
                                     cast_matmuls_to_bf16=False)
    out_small = jax.block_until_ready(out_small)
    assert out_small.shape == (2,)
    assert jnp.allclose(out_small, ref_small, atol=1e-4, rtol=1e-4), (out_small, ref_small)

    print("KERNEL_OK")
</pallas_src>

<mosaic_0001>
module attributes {stable_mosaic.version = 11 : i64} {
  func.func @_reward_kernel(%arg0: i32, %arg1: memref<128x16xf32, #tpu.memory_space<vmem>>, %arg2: memref<16x32xf32, #tpu.memory_space<vmem>>, %arg3: memref<1x32xf32, #tpu.memory_space<vmem>>, %arg4: memref<32x32xf32, #tpu.memory_space<vmem>>, %arg5: memref<1x32xf32, #tpu.memory_space<vmem>>, %arg6: memref<32x32xf32, #tpu.memory_space<vmem>>, %arg7: memref<1x32xf32, #tpu.memory_space<vmem>>, %arg8: memref<32x32xf32, #tpu.memory_space<vmem>>, %arg9: memref<1x32xf32, #tpu.memory_space<vmem>>, %arg10: memref<1x32xf32, #tpu.memory_space<vmem>>, %arg11: memref<1x1xf32, #tpu.memory_space<smem>>, %arg12: memref<1x128xf32, #tpu.memory_space<vmem>>) attributes {dimension_semantics = [#tpu.dimension_semantics<parallel>], iteration_bounds = array<i64: 2>, scalar_prefetch = 0 : i64, scratch_operands = 0 : i64, tpu.core_type = #tpu.core_type<tc>, window_params = [{transform_indices = @transform_0, window_bounds = array<i64: 128, 16>}, {pipeline_mode = #tpu.pipeline_mode<synchronous>, transform_indices = @transform_1, window_bounds = array<i64: 16, 32>}, {pipeline_mode = #tpu.pipeline_mode<synchronous>, transform_indices = @transform_2, window_bounds = array<i64: 1, 32>}, {pipeline_mode = #tpu.pipeline_mode<synchronous>, transform_indices = @transform_3, window_bounds = array<i64: 32, 32>}, {pipeline_mode = #tpu.pipeline_mode<synchronous>, transform_indices = @transform_4, window_bounds = array<i64: 1, 32>}, {pipeline_mode = #tpu.pipeline_mode<synchronous>, transform_indices = @transform_5, window_bounds = array<i64: 32, 32>}, {pipeline_mode = #tpu.pipeline_mode<synchronous>, transform_indices = @transform_6, window_bounds = array<i64: 1, 32>}, {pipeline_mode = #tpu.pipeline_mode<synchronous>, transform_indices = @transform_7, window_bounds = array<i64: 32, 32>}, {pipeline_mode = #tpu.pipeline_mode<synchronous>, transform_indices = @transform_8, window_bounds = array<i64: 1, 32>}, {pipeline_mode = #tpu.pipeline_mode<synchronous>, transform_indices = @transform_9, window_bounds = array<i64: 1, 32>}, {transform_indices = @transform_10, window_bounds = array<i64: 1, 1>}, {transform_indices = @transform_11, window_bounds = array<i64: 1, 128>}]} {
    %c0 = arith.constant 0 : index
    %c0_0 = arith.constant 0 : index
    %0 = vector.load %arg1[%c0, %c0_0] : memref<128x16xf32, #tpu.memory_space<vmem>>, vector<128x16xf32>
    %c0_1 = arith.constant 0 : index
    %c0_2 = arith.constant 0 : index
    %1 = vector.load %arg2[%c0_1, %c0_2] : memref<16x32xf32, #tpu.memory_space<vmem>>, vector<16x32xf32>
    %cst = arith.constant dense<0.000000e+00> : vector<128x32xf32>
    %2 = tpu.matmul %0, %1, %cst {dimension_numbers = #tpu.dot_dimension_numbers<[1], [0], [0], [1], [0, 0, 1, 1], [], []>} : vector<128x16xf32>, vector<16x32xf32>, vector<128x32xf32> -> vector<128x32xf32>
    %c0_3 = arith.constant 0 : index
    %c0_4 = arith.constant 0 : index
    %3 = vector.load %arg3[%c0_3, %c0_4] : memref<1x32xf32, #tpu.memory_space<vmem>>, vector<1x32xf32>
    %4 = vector.broadcast %3 : vector<1x32xf32> to vector<128x32xf32>
    %5 = arith.addf %2, %4 : vector<128x32xf32>
    %cst_5 = arith.constant 0.000000e+00 : f32
    %6 = vector.broadcast %cst_5 : f32 to vector<128x32xf32>
    %7 = arith.maximumf %5, %6 : vector<128x32xf32>
    %c0_6 = arith.constant 0 : index
    %c0_7 = arith.constant 0 : index
    %8 = vector.load %arg4[%c0_6, %c0_7] : memref<32x32xf32, #tpu.memory_space<vmem>>, vector<32x32xf32>
    %cst_8 = arith.constant dense<0.000000e+00> : vector<128x32xf32>
    %9 = tpu.matmul %7, %8, %cst_8 {dimension_numbers = #tpu.dot_dimension_numbers<[1], [0], [0], [1], [0, 0, 1, 1], [], []>} : vector<128x32xf32>, vector<32x32xf32>, vector<128x32xf32> -> vector<128x32xf32>
    %c0_9 = arith.constant 0 : index
    %c0_10 = arith.constant 0 : index
    %10 = vector.load %arg5[%c0_9, %c0_10] : memref<1x32xf32, #tpu.memory_space<vmem>>, vector<1x32xf32>
    %11 = vector.broadcast %10 : vector<1x32xf32> to vector<128x32xf32>
    %12 = arith.addf %9, %11 : vector<128x32xf32>
    %cst_11 = arith.constant 0.000000e+00 : f32
    %13 = vector.broadcast %cst_11 : f32 to vector<128x32xf32>
    %14 = arith.maximumf %12, %13 : vector<128x32xf32>
    %c0_12 = arith.constant 0 : index
    %c0_13 = arith.constant 0 : index
    %15 = vector.load %arg6[%c0_12, %c0_13] : memref<32x32xf32, #tpu.memory_space<vmem>>, vector<32x32xf32>
    %cst_14 = arith.constant dense<0.000000e+00> : vector<128x32xf32>
    %16 = tpu.matmul %14, %15, %cst_14 {dimension_numbers = #tpu.dot_dimension_numbers<[1], [0], [0], [1], [0, 0, 1, 1], [], []>} : vector<128x32xf32>, vector<32x32xf32>, vector<128x32xf32> -> vector<128x32xf32>
    %c0_15 = arith.constant 0 : index
    %c0_16 = arith.constant 0 : index
    %17 = vector.load %arg7[%c0_15, %c0_16] : memref<1x32xf32, #tpu.memory_space<vmem>>, vector<1x32xf32>
    %18 = vector.broadcast %17 : vector<1x32xf32> to vector<128x32xf32>
    %19 = arith.addf %16, %18 : vector<128x32xf32>
    %cst_17 = arith.constant 0.000000e+00 : f32
    %20 = vector.broadcast %cst_17 : f32 to vector<128x32xf32>
    %21 = arith.maximumf %19, %20 : vector<128x32xf32>
    %c0_18 = arith.constant 0 : index
    %c0_19 = arith.constant 0 : index
    %22 = vector.load %arg8[%c0_18, %c0_19] : memref<32x32xf32, #tpu.memory_space<vmem>>, vector<32x32xf32>
    %cst_20 = arith.constant dense<0.000000e+00> : vector<128x32xf32>
    %23 = tpu.matmul %21, %22, %cst_20 {dimension_numbers = #tpu.dot_dimension_numbers<[1], [0], [0], [1], [0, 0, 1, 1], [], []>} : vector<128x32xf32>, vector<32x32xf32>, vector<128x32xf32> -> vector<128x32xf32>
    %c0_21 = arith.constant 0 : index
    %c0_22 = arith.constant 0 : index
    %24 = vector.load %arg9[%c0_21, %c0_22] : memref<1x32xf32, #tpu.memory_space<vmem>>, vector<1x32xf32>
    %25 = vector.broadcast %24 : vector<1x32xf32> to vector<128x32xf32>
    %26 = arith.addf %23, %25 : vector<128x32xf32>
    %cst_23 = arith.constant 0.000000e+00 : f32
    %27 = vector.broadcast %cst_23 : f32 to vector<128x32xf32>
    %28 = arith.maximumf %26, %27 : vector<128x32xf32>
    %c0_24 = arith.constant 0 : index
    %c0_25 = arith.constant 0 : index
    %29 = vector.load %arg10[%c0_24, %c0_25] : memref<1x32xf32, #tpu.memory_space<vmem>>, vector<1x32xf32>
    %30 = vector.broadcast %29 : vector<1x32xf32> to vector<128x32xf32>
    %31 = arith.mulf %28, %30 : vector<128x32xf32>
    %cst_26 = arith.constant dense<0.000000e+00> : vector<128xf32>
    %32 = vector.multi_reduction <add>, %31, %cst_26 [1] : vector<128x32xf32> to vector<128xf32>
    %c0_27 = arith.constant 0 : index
    %c0_28 = arith.constant 0 : index
    %33 = memref.load %arg11[%c0_27, %c0_28] : memref<1x1xf32, #tpu.memory_space<smem>>
    %34 = vector.broadcast %33 : f32 to vector<128xf32>
    %35 = arith.addf %32, %34 : vector<128xf32>
    %cst_29 = arith.constant -1.000000e+00 : f32
    %cst_30 = arith.constant 1.000000e+00 : f32
    %36 = vector.broadcast %cst_29 : f32 to vector<128xf32>
    %37 = arith.maximumf %36, %35 : vector<128xf32>
    %38 = vector.broadcast %cst_30 : f32 to vector<128xf32>
    %39 = arith.minimumf %38, %37 : vector<128xf32>
    %40 = vector.shape_cast %39 : vector<128xf32> to vector<1x128xf32>
    %c0_31 = arith.constant 0 : index
    %c0_32 = arith.constant 0 : index
    %41 = vector.load %arg12[%c0_31, %c0_32] : memref<1x128xf32, #tpu.memory_space<vmem>>, vector<1x128xf32>
    tpu.vector_store %arg12[%c0_31, %c0_32], %40 {strides = array<i32>} : memref<1x128xf32, #tpu.memory_space<vmem>>, vector<1x128xf32>,
    return
  }
  func.func @transform_0(%arg0: i32) -> (i32, i32) {
    %c0_i32 = arith.constant 0 : i32
    %c0_i32_0 = arith.constant 0 : i32
    return %arg0, %c0_i32 : i32, i32
  }
  func.func @transform_1(%arg0: i32) -> (i32, i32) {
    %c0_i32 = arith.constant 0 : i32
    %c0_i32_0 = arith.constant 0 : i32
    %c0_i32_1 = arith.constant 0 : i32
    return %c0_i32, %c0_i32_0 : i32, i32
  }
  func.func @transform_2(%arg0: i32) -> (i32, i32) {
    %c0_i32 = arith.constant 0 : i32
    %c0_i32_0 = arith.constant 0 : i32
    %c0_i32_1 = arith.constant 0 : i32
    return %c0_i32, %c0_i32_0 : i32, i32
  }
  func.func @transform_3(%arg0: i32) -> (i32, i32) {
    %c0_i32 = arith.constant 0 : i32
    %c0_i32_0 = arith.constant 0 : i32
    %c0_i32_1 = arith.constant 0 : i32
    return %c0_i32, %c0_i32_0 : i32, i32
  }
  func.func @transform_4(%arg0: i32) -> (i32, i32) {
    %c0_i32 = arith.constant 0 : i32
    %c0_i32_0 = arith.constant 0 : i32
    %c0_i32_1 = arith.constant 0 : i32
    return %c0_i32, %c0_i32_0 : i32, i32
  }
  func.func @transform_5(%arg0: i32) -> (i32, i32) {
    %c0_i32 = arith.constant 0 : i32
    %c0_i32_0 = arith.constant 0 : i32
    %c0_i32_1 = arith.constant 0 : i32
    return %c0_i32, %c0_i32_0 : i32, i32
  }
  func.func @transform_6(%arg0: i32) -> (i32, i32) {
    %c0_i32 = arith.constant 0 : i32
    %c0_i32_0 = arith.constant 0 : i32
    %c0_i32_1 = arith.constant 0 : i32
    return %c0_i32, %c0_i32_0 : i32, i32
  }
  func.func @transform_7(%arg0: i32) -> (i32, i32) {
    %c0_i32 = arith.constant 0 : i32
    %c0_i32_0 = arith.constant 0 : i32
    %c0_i32_1 = arith.constant 0 : i32
    return %c0_i32, %c0_i32_0 : i32, i32
  }
  func.func @transform_8(%arg0: i32) -> (i32, i32) {
    %c0_i32 = arith.constant 0 : i32
    %c0_i32_0 = arith.constant 0 : i32
    %c0_i32_1 = arith.constant 0 : i32
    return %c0_i32, %c0_i32_0 : i32, i32
  }
  func.func @transform_9(%arg0: i32) -> (i32, i32) {
    %c0_i32 = arith.constant 0 : i32
    %c0_i32_0 = arith.constant 0 : i32
    %c0_i32_1 = arith.constant 0 : i32
    return %c0_i32, %c0_i32_0 : i32, i32
  }
  func.func @transform_10(%arg0: i32) -> (i32, i32) {
    %c0_i32 = arith.constant 0 : i32
    %c0_i32_0 = arith.constant 0 : i32
    %c0_i32_1 = arith.constant 0 : i32
    return %c0_i32, %c0_i32_0 : i32, i32
  }
  func.func @transform_11(%arg0: i32) -> (i32, i32) {
    %c0_i32 = arith.constant 0 : i32
    %c0_i32_0 = arith.constant 0 : i32
    return %c0_i32, %arg0 : i32, i32
  }
}

</mosaic_0001>

<llo_original>
// kernel: tpu_custom_call.1
$region0: #{tpu_custom_call.1}
  #allocation0 [shape = 'u32[]', space=smem, size = 0x4, offset = 0x4, fixed_abs, tag = 'smem constant byte address 0x4 - core index']
  #allocation1 [shape = 'u32[144,128]{1,0:T(1,128)}', space=vmem, size = 0x12000, scoped, tag = 'internal scratch']
  #allocation2 [shape = 'f32[1,1]{1,0:T(1,128)S(6)}', space=smem, size = 0x200, scoped, tag = 'scoped memory for tpu_custom_call.1']
  %s0 = inlined_call_operand.vmem [shape: f32[256,16], index: 0, kind: input, shape index: {}]
  %s1 = inlined_call_operand.vmem [shape: f32[16,32], index: 1, kind: input, shape index: {}]
  %s2 = inlined_call_operand.vmem [shape: f32[1,32], index: 2, kind: input, shape index: {}]
  %s3 = inlined_call_operand.vmem [shape: f32[32,32], index: 3, kind: input, shape index: {}]
  %s4 = inlined_call_operand.vmem [shape: f32[1,32], index: 4, kind: input, shape index: {}]
  %s5 = inlined_call_operand.vmem [shape: f32[32,32], index: 5, kind: input, shape index: {}]
  %s6 = inlined_call_operand.vmem [shape: f32[1,32], index: 6, kind: input, shape index: {}]
  %s7 = inlined_call_operand.vmem [shape: f32[32,32], index: 7, kind: input, shape index: {}]
  %s8 = inlined_call_operand.vmem [shape: f32[1,32], index: 8, kind: input, shape index: {}]
  %s9 = inlined_call_operand.vmem [shape: f32[1,32], index: 9, kind: input, shape index: {}]
  %s10 = inlined_call_operand.<no memory space> [shape: f32[1,1], index: 10, kind: input, shape index: {}]
  %s11 = inlined_call_operand.hbm [shape: f32[1,256], index: 11, kind: output, shape index: {}]
  %s12 = sld [smem:[#allocation0]]
  $region77: #{tpu_custom_call.1} parent=0
    _
  %s14 = ssub.s32 1, %s12
  %s15 = scalar_select 0, %s14, %s12
  %16 = sst [smem:[#allocation2]] %s10
  $region1: #{tpu_custom_call.1} parent=0
    #allocation3 [shape = 'u8[1024]{0}', space=vmem, size = 0x400, scoped, tag = 'output window, operand 0']
    #allocation4 [shape = 's32[2]{0}', space=sflag, size = 0x8, scoped, tag = 'scoped memory for tpu_custom_call.1']
    %17 = vsyncpa [#allocation4], 0
    %s18 = scalar_lea.sflag [#allocation4], 1
    %19 = vsyncpa %s18, 0
    loop: start=0, step=1, limit=4
    $region2: #{tpu_custom_call.1} parent=1 // loop_pre_header
      _
    $region3: #{tpu_custom_call.1} parent=1 // loop_header
      %s21 = sphi 0, %s25
      %p22 = scmp.ge.s32.totalorder %s21, 4
      %s31 = sphi 0, %s33
      %s34 = sphi 0, %s31
      %s35 = sphi 0, %s34
      %s51 = sphi 0, %s35
      %s55 = sphi 0, %s55
      %s57 = sphi 0, %s55
      %s58 = sphi 0, %s57
      %s72 = sphi 0, %s58
      %s76 = sphi 0, %s76
      %s78 = sphi 0, %s76
      %s79 = sphi 0, %s78
      %s93 = sphi 0, %s79
      %s97 = sphi 0, %s97
      %s99 = sphi 0, %s97
      %s100 = sphi 0, %s99
      %s114 = sphi 0, %s100
      %s118 = sphi 0, %s118
      %s120 = sphi 0, %s118
      %s121 = sphi 0, %s120
      %s135 = sphi 0, %s121
      %s139 = sphi 0, %s139
      %s141 = sphi 0, %s139
      %s142 = sphi 0, %s141
      %s156 = sphi 0, %s142
      %s160 = sphi 0, %s160
      %s162 = sphi 0, %s160
      %s163 = sphi 0, %s162
      %s177 = sphi 0, %s163
      %s181 = sphi 0, %s181
      %s183 = sphi 0, %s181
      %s184 = sphi 0, %s183
      %s198 = sphi 0, %s184
      %s202 = sphi 0, %s202
      %s204 = sphi 0, %s202
      %s205 = sphi 0, %s204
      %s219 = sphi 0, %s205
      %s223 = sphi 0, %s223
      %s225 = sphi 0, %s223
      %s226 = sphi 0, %s225
      %s240 = sphi 0, %s226
      %s244 = sphi 0, %s244
      %s246 = sphi 0, %s244
      %s247 = sphi 0, %s246
      %s261 = sphi 0, %s247
      %s267 = sphi 0, %s269
      %s270 = sphi 0, %s267
      %s271 = sphi 0, %s270
      %s287 = sphi 0, %s271
    $region4: #{tpu_custom_call.1} parent=1 // loop_header_branch
      %24 = sbr.rel (%p22) target = $region8
    $region5: #{tpu_custom_call.1} parent=1 // loop_body
      %s26 = ssub.s32 %s21, 1
      %s27 = ssub.s32 %s21, 2
      %s28 = sadd.s32 %s21, 1
      %s29 = ssub.s32 %s21, %s28
      %p30 = scmp.eq.s32.totalorder %s29, 0
      %s32 = sadd.s32 %s31, 1
      %s33 = scalar_select %p30, %s31, %s32
      %p36 = pneg %p30
      %p37 = scmp.eq.s32.totalorder %s21, 1
      %p38 = por %p36, %p37
      %p39 = scmp.ne.s32.totalorder %s31, %s34
      %p40 = scmp.eq.s32.totalorder %s21, 0
      %p41 = por %p39, %p40
      %p42 = scmp.ne.s32.totalorder %s31, %s34
      %p43 = scmp.eq.s32.totalorder %s26, 1
      %p44 = por %p42, %p43
      %p45 = scmp.ne.s32.totalorder %s34, %s35
      %p46 = scmp.eq.s32.totalorder %s26, 0
      %p47 = por %p45, %p46
      %p48 = scmp.ne.s32.totalorder %s34, %s35
      %p49 = scmp.eq.s32.totalorder %s27, 1
      %p50 = por %p48, %p49
      %p52 = scmp.ne.s32.totalorder %s35, %s51
      %p53 = scmp.eq.s32.totalorder %s27, 0
      %p54 = por %p52, %p53
      %s56 = sadd.s32 %s55, 1
      %p59 = scmp.eq.s32.totalorder %s21, 1
      %p60 = scmp.ne.s32.totalorder %s55, %s57
      %p61 = scmp.eq.s32.totalorder %s21, 0
      %p62 = por %p60, %p61
      %p63 = scmp.ne.s32.totalorder %s55, %s57
      %p64 = scmp.eq.s32.totalorder %s26, 1
      %p65 = por %p63, %p64
      %p66 = scmp.ne.s32.totalorder %s57, %s58
      %p67 = scmp.eq.s32.totalorder %s26, 0
      %p68 = por %p66, %p67
      %p69 = scmp.ne.s32.totalorder %s57, %s58
      %p70 = scmp.eq.s32.totalorder %s27, 1
      %p71 = por %p69, %p70
      %p73 = scmp.ne.s32.totalorder %s58, %s72
      %p74 = scmp.eq.s32.totalorder %s27, 0
      %p75 = por %p73, %p74
      %s77 = sadd.s32 %s76, 1
      %p80 = scmp.eq.s32.totalorder %s21, 1
      %p81 = scmp.ne.s32.totalorder %s76, %s78
      %p82 = scmp.eq.s32.totalorder %s21, 0
      %p83 = por %p81, %p82
      %p84 = scmp.ne.s32.totalorder %s76, %s78
      %p85 = scmp.eq.s32.totalorder %s26, 1
      %p86 = por %p84, %p85
      %p87 = scmp.ne.s32.totalorder %s78, %s79
      %p88 = scmp.eq.s32.totalorder %s26, 0
      %p89 = por %p87, %p88
      %p90 = scmp.ne.s32.totalorder %s78, %s79
      %p91 = scmp.eq.s32.totalorder %s27, 1
      %p92 = por %p90, %p91
      %p94 = scmp.ne.s32.totalorder %s79, %s93
      %p95 = scmp.eq.s32.totalorder %s27, 0
      %p96 = por %p94, %p95
      %s98 = sadd.s32 %s97, 1
      %p101 = scmp.eq.s32.totalorder %s21, 1
      %p102 = scmp.ne.s32.totalorder %s97, %s99
      %p103 = scmp.eq.s32.totalorder %s21, 0
      %p104 = por %p102, %p103
      %p105 = scmp.ne.s32.totalorder %s97, %s99
      %p106 = scmp.eq.s32.totalorder %s26, 1
      %p107 = por %p105, %p106
      %p108 = scmp.ne.s32.totalorder %s99, %s100
      %p109 = scmp.eq.s32.totalorder %s26, 0
      %p110 = por %p108, %p109
      %p111 = scmp.ne.s32.totalorder %s99, %s100
      %p112 = scmp.eq.s32.totalorder %s27, 1
      %p113 = por %p111, %p112
      %p115 = scmp.ne.s32.totalorder %s100, %s114
      %p116 = scmp.eq.s32.totalorder %s27, 0
      %p117 = por %p115, %p116
      %s119 = sadd.s32 %s118, 1
      %p122 = scmp.eq.s32.totalorder %s21, 1
      %p123 = scmp.ne.s32.totalorder %s118, %s120
      %p124 = scmp.eq.s32.totalorder %s21, 0
      %p125 = por %p123, %p124
      %p126 = scmp.ne.s32.totalorder %s118, %s120
      %p127 = scmp.eq.s32.totalorder %s26, 1
      %p128 = por %p126, %p127
      %p129 = scmp.ne.s32.totalorder %s120, %s121
      %p130 = scmp.eq.s32.totalorder %s26, 0
      %p131 = por %p129, %p130
      %p132 = scmp.ne.s32.totalorder %s120, %s121
      %p133 = scmp.eq.s32.totalorder %s27, 1
      %p134 = por %p132, %p133
      %p136 = scmp.ne.s32.totalorder %s121, %s135
      %p137 = scmp.eq.s32.totalorder %s27, 0
      %p138 = por %p136, %p137
      %s140 = sadd.s32 %s139, 1
      %p143 = scmp.eq.s32.totalorder %s21, 1
      %p144 = scmp.ne.s32.totalorder %s139, %s141
      %p145 = scmp.eq.s32.totalorder %s21, 0
      %p146 = por %p144, %p145
      %p147 = scmp.ne.s32.totalorder %s139, %s141
      %p148 = scmp.eq.s32.totalorder %s26, 1
      %p149 = por %p147, %p148
      %p150 = scmp.ne.s32.totalorder %s141, %s142
      %p151 = scmp.eq.s32.totalorder %s26, 0
      %p152 = por %p150, %p151
      %p153 = scmp.ne.s32.totalorder %s141, %s142
      %p154 = scmp.eq.s32.totalorder %s27, 1
      %p155 = por %p153, %p154
      %p157 = scmp.ne.s32.totalorder %s142, %s156
      %p158 = scmp.eq.s32.totalorder %s27, 0
      %p159 = por %p157, %p158
      %s161 = sadd.s32 %s160, 1
      %p164 = scmp.eq.s32.totalorder %s21, 1
      %p165 = scmp.ne.s32.totalorder %s160, %s162
      %p166 = scmp.eq.s32.totalorder %s21, 0
      %p167 = por %p165, %p166
      %p168 = scmp.ne.s32.totalorder %s160, %s162
      %p169 = scmp.eq.s32.totalorder %s26, 1
      %p170 = por %p168, %p169
      %p171 = scmp.ne.s32.totalorder %s162, %s163
      %p172 = scmp.eq.s32.totalorder %s26, 0
      %p173 = por %p171, %p172
      %p174 = scmp.ne.s32.totalorder %s162, %s163
      %p175 = scmp.eq.s32.totalorder %s27, 1
      %p176 = por %p174, %p175
      %p178 = scmp.ne.s32.totalorder %s163, %s177
      %p179 = scmp.eq.s32.totalorder %s27, 0
      %p180 = por %p178, %p179
      %s182 = sadd.s32 %s181, 1
      %p185 = scmp.eq.s32.totalorder %s21, 1
      %p186 = scmp.ne.s32.totalorder %s181, %s183
      %p187 = scmp.eq.s32.totalorder %s21, 0
      %p188 = por %p186, %p187
      %p189 = scmp.ne.s32.totalorder %s181, %s183
      %p190 = scmp.eq.s32.totalorder %s26, 1
      %p191 = por %p189, %p190
      %p192 = scmp.ne.s32.totalorder %s183, %s184
      %p193 = scmp.eq.s32.totalorder %s26, 0
      %p194 = por %p192, %p193
      %p195 = scmp.ne.s32.totalorder %s183, %s184
      %p196 = scmp.eq.s32.totalorder %s27, 1
      %p197 = por %p195, %p196
      %p199 = scmp.ne.s32.totalorder %s184, %s198
      %p200 = scmp.eq.s32.totalorder %s27, 0
      %p201 = por %p199, %p200
      %s203 = sadd.s32 %s202, 1
      %p206 = scmp.eq.s32.totalorder %s21, 1
      %p207 = scmp.ne.s32.totalorder %s202, %s204
      %p208 = scmp.eq.s32.totalorder %s21, 0
      %p209 = por %p207, %p208
      %p210 = scmp.ne.s32.totalorder %s202, %s204
      %p211 = scmp.eq.s32.totalorder %s26, 1
      %p212 = por %p210, %p211
      %p213 = scmp.ne.s32.totalorder %s204, %s205
      %p214 = scmp.eq.s32.totalorder %s26, 0
      %p215 = por %p213, %p214
      %p216 = scmp.ne.s32.totalorder %s204, %s205
      %p217 = scmp.eq.s32.totalorder %s27, 1
      %p218 = por %p216, %p217
      %p220 = scmp.ne.s32.totalorder %s205, %s219
      %p221 = scmp.eq.s32.totalorder %s27, 0
      %p222 = por %p220, %p221
      %s224 = sadd.s32 %s223, 1
      %p227 = scmp.eq.s32.totalorder %s21, 1
      %p228 = scmp.ne.s32.totalorder %s223, %s225
      %p229 = scmp.eq.s32.totalorder %s21, 0
      %p230 = por %p228, %p229
      %p231 = scmp.ne.s32.totalorder %s223, %s225
      %p232 = scmp.eq.s32.totalorder %s26, 1
      %p233 = por %p231, %p232
      %p234 = scmp.ne.s32.totalorder %s225, %s226
      %p235 = scmp.eq.s32.totalorder %s26, 0
      %p236 = por %p234, %p235
      %p237 = scmp.ne.s32.totalorder %s225, %s226
      %p238 = scmp.eq.s32.totalorder %s27, 1
      %p239 = por %p237, %p238
      %p241 = scmp.ne.s32.totalorder %s226, %s240
      %p242 = scmp.eq.s32.totalorder %s27, 0
      %p243 = por %p241, %p242
      %s245 = sadd.s32 %s244, 1
      %p248 = scmp.eq.s32.totalorder %s21, 1
      %p249 = scmp.ne.s32.totalorder %s244, %s246
      %p250 = scmp.eq.s32.totalorder %s21, 0
      %p251 = por %p249, %p250
      %p252 = scmp.ne.s32.totalorder %s244, %s246
      %p253 = scmp.eq.s32.totalorder %s26, 1
      %p254 = por %p252, %p253
      %p255 = scmp.ne.s32.totalorder %s246, %s247
      %p256 = scmp.eq.s32.totalorder %s26, 0
      %p257 = por %p255, %p256
      %p258 = scmp.ne.s32.totalorder %s246, %s247
      %p259 = scmp.eq.s32.totalorder %s27, 1
      %p260 = por %p258, %p259
      %p262 = scmp.ne.s32.totalorder %s247, %s261
      %p263 = scmp.eq.s32.totalorder %s27, 0
      %p264 = por %p262, %p263
      %s265 = ssub.s32 %s21, %s28
      %p266 = scmp.eq.s32.totalorder %s265, 0
      %s268 = sadd.s32 %s267, 1
      %s269 = scalar_select %p266, %s267, %s268
      %p272 = pneg %p266
      %p273 = scmp.eq.s32.totalorder %s21, 1
      %p274 = por %p272, %p273
      %p275 = scmp.ne.s32.totalorder %s267, %s270
      %p276 = scmp.eq.s32.totalorder %s21, 0
      %p277 = por %p275, %p276
      %p278 = scmp.ne.s32.totalorder %s267, %s270
      %p279 = scmp.eq.s32.totalorder %s26, 1
      %p280 = por %p278, %p279
      %p281 = scmp.ne.s32.totalorder %s270, %s271
      %p282 = scmp.eq.s32.totalorder %s26, 0
      %p283 = por %p281, %p282
      %p284 = scmp.ne.s32.totalorder %s270, %s271
      %p285 = scmp.eq.s32.totalorder %s27, 1
      %p286 = por %p284, %p285
      %p288 = scmp.ne.s32.totalorder %s271, %s287
      %p289 = scmp.eq.s32.totalorder %s27, 0
      %p290 = por %p288, %p289
      %p291 = scmp.le.s32.totalorder 1, %s21
      %p292 = scmp.lt.s32.totalorder %s21, 3
      %p293 = pnand %p291, %p292
      %p294 = pneg %p293
      // Predicated region
      $region9: #{tpu_custom_call.1} parent=5 // pred_check
        _
      $region10: #{tpu_custom_call.1} parent=5 // pred_check_branch
        %296 = sbr.rel (%p293) target = $region12
      $region11: #{tpu_custom_call.1} parent=5 // pred_region
        %s297 = ssub.s32 %s21, 1
        // Predicated region
        $region13: #{tpu_custom_call.1} parent=11 // pred_check
          %p298 = pneg %p68
        $region14: #{tpu_custom_call.1} parent=11 // pred_check_branch
          %300 = sbr.rel (%p298) target = $region16
        $region15: #{tpu_custom_call.1} parent=11 // pred_region
          _
        $region16: #{tpu_custom_call.1} parent=11 // pred_fallthru
          _
        // Predicated region
        $region17: #{tpu_custom_call.1} parent=11 // pred_check
          %p301 = pneg %p89
        $region18: #{tpu_custom_call.1} parent=11 // pred_check_branch
          %303 = sbr.rel (%p301) target = $region20
        $region19: #{tpu_custom_call.1} parent=11 // pred_region
          _
        $region20: #{tpu_custom_call.1} parent=11 // pred_fallthru
          _
        // Predicated region
        $region21: #{tpu_custom_call.1} parent=11 // pred_check
          %p304 = pneg %p110
        $region22: #{tpu_custom_call.1} parent=11 // pred_check_branch
          %306 = sbr.rel (%p304) target = $region24
        $region23: #{tpu_custom_call.1} parent=11 // pred_region
          _
        $region24: #{tpu_custom_call.1} parent=11 // pred_fallthru
          _
        // Predicated region
        $region25: #{tpu_custom_call.1} parent=11 // pred_check
          %p307 = pneg %p131
        $region26: #{tpu_custom_call.1} parent=11 // pred_check_branch
          %309 = sbr.rel (%p307) target = $region28
        $region27: #{tpu_custom_call.1} parent=11 // pred_region
          _
        $region28: #{tpu_custom_call.1} parent=11 // pred_fallthru
          _
        // Predicated region
        $region29: #{tpu_custom_call.1} parent=11 // pred_check
          %p310 = pneg %p152
        $region30: #{tpu_custom_call.1} parent=11 // pred_check_branch
          %312 = sbr.rel (%p310) target = $region32
        $region31: #{tpu_custom_call.1} parent=11 // pred_region
          _
        $region32: #{tpu_custom_call.1} parent=11 // pred_fallthru
          _
        // Predicated region
        $region33: #{tpu_custom_call.1} parent=11 // pred_check
          %p313 = pneg %p173
        $region34: #{tpu_custom_call.1} parent=11 // pred_check_branch
          %315 = sbr.rel (%p313) target = $region36
        $region35: #{tpu_custom_call.1} parent=11 // pred_region
          _
        $region36: #{tpu_custom_call.1} parent=11 // pred_fallthru
          _
        // Predicated region
        $region37: #{tpu_custom_call.1} parent=11 // pred_check
          %p316 = pneg %p194
        $region38: #{tpu_custom_call.1} parent=11 // pred_check_branch
          %318 = sbr.rel (%p316) target = $region40
        $region39: #{tpu_custom_call.1} parent=11 // pred_region
          _
        $region40: #{tpu_custom_call.1} parent=11 // pred_fallthru
          _
        // Predicated region
        $region41: #{tpu_custom_call.1} parent=11 // pred_check
          %p319 = pneg %p215
        $region42: #{tpu_custom_call.1} parent=11 // pred_check_branch
          %321 = sbr.rel (%p319) target = $region44
        $region43: #{tpu_custom_call.1} parent=11 // pred_region
          _
        $region44: #{tpu_custom_call.1} parent=11 // pred_fallthru
          _
        // Predicated region
        $region45: #{tpu_custom_call.1} parent=11 // pred_check
          %p322 = pneg %p236
        $region46: #{tpu_custom_call.1} parent=11 // pred_check_branch
          %324 = sbr.rel (%p322) target = $region48
        $region47: #{tpu_custom_call.1} parent=11 // pred_region
          _
        $region48: #{tpu_custom_call.1} parent=11 // pred_fallthru
          _
        // Predicated region
        $region49: #{tpu_custom_call.1} parent=11 // pred_check
          %p325 = pneg %p257
        $region50: #{tpu_custom_call.1} parent=11 // pred_check_branch
          %327 = sbr.rel (%p325) target = $region52
        $region51: #{tpu_custom_call.1} parent=11 // pred_region
          _
        $region52: #{tpu_custom_call.1} parent=11 // pred_fallthru
          _
      $region12: #{tpu_custom_call.1} parent=5 // pred_fallthru
        _
      %p328 = scmp.lt.s32.totalorder %s21, 2
      // Predicated region
      $region53: #{tpu_custom_call.1} parent=5 // pred_check
        %p329 = pneg %p328
      $region54: #{tpu_custom_call.1} parent=5 // pred_check_branch
        %331 = sbr.rel (%p329) target = $region56
      $region55: #{tpu_custom_call.1} parent=5 // pred_region
        // Predicated region
        $region57: #{tpu_custom_call.1} parent=55 // pred_check
          %p332 = pneg %p41
        $region58: #{tpu_custom_call.1} parent=55 // pred_check_branch
          %334 = sbr.rel (%p332) target = $region60
        $region59: #{tpu_custom_call.1} parent=55 // pred_region
          %s335 = smul.u32 16, %s21
          %p336 = scmp.lt.s32.totalorder %s335, 31
          %s337 = scalar_select %p336, %s335, 31
          %s338 = smul.addr %s337, 8
          %s339 = scalar_lea.vmem %s0, %s338
          %s340 = smul.u32 16, %s21
        $region60: #{tpu_custom_call.1} parent=55 // pred_fallthru
          _
      $region56: #{tpu_custom_call.1} parent=5 // pred_fallthru
        _
      %p341 = scmp.le.s32.totalorder 1, %s21
      %p342 = scmp.lt.s32.totalorder %s21, 3
      %p343 = pnand %p341, %p342
      %p344 = pneg %p343
      // Predicated region
      $region61: #{tpu_custom_call.1} parent=5 // pred_check
        _
      $region62: #{tpu_custom_call.1} parent=5 // pred_check_branch
        %346 = sbr.rel (%p343) target = $region64
      $region63: #{tpu_custom_call.1} parent=5 // pred_region
        %s347 = ssub.s32 %s21, 1
        %s348 = smul.u32 16, %s26
        %p349 = scmp.lt.s32.totalorder %s348, 31
        %s350 = scalar_select %p349, %s348, 31
        %s351 = smul.addr %s350, 8
        %s352 = scalar_lea.vmem %s0, %s351
        %p353 = pneg %p47
        %p354 = pneg %p44
        %p355 = pneg %p68
        %p356 = pneg %p65
        %p357 = pneg %p89
        %p358 = pneg %p86
        %p359 = pneg %p110
        %p360 = pneg %p107
        %p361 = pneg %p131
        %p362 = pneg %p128
        %p363 = pneg %p152
        %p364 = pneg %p149
        %p365 = pneg %p173
        %p366 = pneg %p170
        %p367 = pneg %p194
        %p368 = pneg %p191
        %p369 = pneg %p215
        %p370 = pneg %p212
        %p371 = pneg %p236
        %p372 = pneg %p233
        %p373 = pneg %p257
        %p374 = pneg %p254
        %p375 = pneg %p283
        %p376 = pneg %p280
        %s377 = sand.u32 %s270, 1
        %s378 = scalar_lea.sflag [#allocation4], %s377
        %s379 = sand.u32 %s270, 1
        %s380 = scalar_lea.vmem [#allocation3], %s379
        %s381 = smul.u32 16, %s26
        %p382 = scmp.lt.s32.totalorder %s381, 31
        %s383 = scalar_select %p382, %s381, 31
        %s384 = smul.addr %s383, 8
        %s385 = scalar_lea.vmem %s0, %s384
        %s386 = smul.u32 16, %s26
        %v387 = vld [vmem:[%s385] sm:$0xff]
        %v388 = vld [vmem:[%s385 + $0x8] sm:$0xff]
        %v389 = vld [vmem:[%s385 + $0x10] sm:$0xff]
        %v390 = vld [vmem:[%s385 + $0x18] sm:$0xff]
        %v391 = vld [vmem:[%s385 + $0x20] sm:$0xff]
        %v392 = vld [vmem:[%s385 + $0x28] sm:$0xff]
        %v393 = vld [vmem:[%s385 + $0x30] sm:$0xff]
        %v394 = vld [vmem:[%s385 + $0x38] sm:$0xff]
        %v395 = vld [vmem:[%s385 + $0x40] sm:$0xff]
        %v396 = vld [vmem:[%s385 + $0x48] sm:$0xff]
        %v397 = vld [vmem:[%s385 + $0x50] sm:$0xff]
        %v398 = vld [vmem:[%s385 + $0x58] sm:$0xff]
        %v399 = vld [vmem:[%s385 + $0x60] sm:$0xff]
        %v400 = vld [vmem:[%s385 + $0x68] sm:$0xff]
        %v401 = vld [vmem:[%s385 + $0x70] sm:$0xff]
        %v402 = vld [vmem:[%s385 + $0x78] sm:$0xff]
        %v403 = vld [vmem:[%s1] sm:$0xff]
        %v404 = vld [vmem:[%s1 + $0x8] sm:$0xff]
        %v405 = vld [vmem:[%s2] sm:$0x1]
        %v407 = vlaneseq
        %v408 = vshrl.u32 %v407, 7
        %v409 = vsub.s32 0, %v408
        %v410 = vrot.slane %v405, %v409
        %vm412 = vcmask 130048
        %v414 = vsel %vm412, %v387, 0
        %v417 = vsel %vm412, %v388, 0
        %v420 = vsel %vm412, %v389, 0
        %v423 = vsel %vm412, %v390, 0
        %v426 = vsel %vm412, %v391, 0
        %v429 = vsel %vm412, %v392, 0
        %v432 = vsel %vm412, %v393, 0
        %v435 = vsel %vm412, %v394, 0
        %v438 = vsel %vm412, %v395, 0
        %v441 = vsel %vm412, %v396, 0
        %v444 = vsel %vm412, %v397, 0
        %v447 = vsel %vm412, %v398, 0
        %v450 = vsel %vm412, %v399, 0
        %v453 = vsel %vm412, %v400, 0
        %v456 = vsel %vm412, %v401, 0
        %v459 = vsel %vm412, %v402, 0
        %461 = vmatprep.subr.mxu0 0.0
        %462 = vmatpush1.msra.mxu0 %v403
        %463 = vmatprep.subr.mxu0 0.0
        %464 = vmatpush1.msra.mxu0 %v404
        %465 = vmatprep.subr.mxu0 0.0
        %466 = vmatpush1.msra.mxu0 0.0
        %467 = vmatprep.subr.mxu0 0.0
        %468 = vmatpush1.msra.mxu0 0.0
        %469 = vmatprep.subr.mxu0 0.0
        %470 = vmatpush1.msra.mxu0 0.0
        %471 = vmatprep.subr.mxu0 0.0
        %472 = vmatpush1.msra.mxu0 0.0
        %473 = vmatprep.subr.mxu0 0.0
        %474 = vmatpush1.msra.mxu0 0.0
        %475 = vmatprep.subr.mxu0 0.0
        %476 = vmatpush1.msra.mxu0 0.0
        %477 = vmatprep.subr.mxu0 0.0
        %478 = vmatpush1.msra.mxu0 0.0
        %479 = vmatprep.subr.mxu0 0.0
        %480 = vmatpush1.msra.mxu0 0.0
        %481 = vmatprep.subr.mxu0 0.0
        %482 = vmatpush1.msra.mxu0 0.0
        %483 = vmatprep.subr.mxu0 0.0
        %484 = vmatpush1.msra.mxu0 0.0
        %485 = vmatprep.subr.mxu0 0.0
        %486 = vmatpush1.msra.mxu0 0.0
        %487 = vmatprep.subr.mxu0 0.0
        %488 = vmatpush1.msra.mxu0 0.0
        %489 = vmatprep.subr.mxu0 0.0
        %490 = vmatpush1.msra.mxu0 0.0
        %491 = vmatprep.subr.mxu0 0.0
        %492 = vmatpush1.msra.mxu0 0.0
        %493 = vmatprep.subr.mxu0 0.0
        %494 = vmatpush1.msra.mxu0 0.0
        %495 = vmatprep.subr.mxu0 0.0
        %496 = vmatpush1.msra.mxu0 0.0
        %497 = vmatprep.subr.mxu0 0.0
        %498 = vmatpush1.msra.mxu0 0.0
        %499 = vmatprep.subr.mxu0 0.0
        %500 = vmatpush1.msra.mxu0 0.0
        %501 = vmatprep.subr.mxu0 0.0
        %502 = vmatpush1.msra.mxu0 0.0
        %503 = vmatprep.subr.mxu0 0.0
        %504 = vmatpush1.msra.mxu0 0.0
        %505 = vmatprep.subr.mxu0 0.0
        %506 = vmatpush1.msra.mxu0 0.0
        %507 = vmatprep.subr.mxu0 0.0
        %508 = vmatpush1.msra.mxu0 0.0
        %509 = vmatprep.subr.mxu0 0.0
        %510 = vmatpush1.msra.mxu0 0.0
        %511 = vmatprep.subr.mxu0 0.0
        %512 = vmatpush1.msra.mxu0 0.0
        %513 = vmatprep.subr.mxu0 0.0
        %514 = vmatpush1.msra.mxu0 0.0
        %515 = vmatprep.subr.mxu0 0.0
        %516 = vmatpush1.msra.mxu0 0.0
        %517 = vmatprep.subr.mxu0 0.0
        %518 = vmatpush1.msra.mxu0 0.0
        %519 = vmatprep.subr.mxu0 0.0
        %520 = vmatpush1.msra.mxu0 0.0
        %521 = vmatprep.subr.mxu0 0.0
        %522 = vmatpush1.msra.mxu0 0.0
        %523 = vmatprep.subr.mxu0 0.0
        %524 = vmatpush1.msra.mxu0 0.0
        %525 = vmatprep.mubr.f32.mxu0 0.0
        %526 = vmatmul.mubr.f32.gmra.mrb[0].mxu0 %v414
        %v527 = vpop.f32.mrb[0].mxu0
        %v528 = vadd.f32 %v410, %v527
        %v529 = vpop.f32.mrb[0].mxu0
        %530 = vmatprep.mubr.f32.mxu0 0.0
        %531 = vmatmul.mubr.f32.gmra.mrb[0].mxu0 %v417
        %v532 = vpop.f32.mrb[0].mxu0
        %v533 = vadd.f32 %v410, %v532
        %v534 = vpop.f32.mrb[0].mxu0
        %535 = vmatprep.mubr.f32.mxu0 0.0
        %536 = vmatmul.mubr.f32.gmra.mrb[0].mxu0 %v420
        %v537 = vpop.f32.mrb[0].mxu0
        %v538 = vadd.f32 %v410, %v537
        %v539 = vpop.f32.mrb[0].mxu0
        %540 = vmatprep.mubr.f32.mxu0 0.0
        %541 = vmatmul.mubr.f32.gmra.mrb[0].mxu0 %v423
        %v542 = vpop.f32.mrb[0].mxu0
        %v543 = vadd.f32 %v410, %v542
        %v544 = vpop.f32.mrb[0].mxu0
        %545 = vmatprep.mubr.f32.mxu0 0.0
        %546 = vmatmul.mubr.f32.gmra.mrb[0].mxu0 %v426
        %v547 = vpop.f32.mrb[0].mxu0
        %v548 = vadd.f32 %v410, %v547
        %v549 = vpop.f32.mrb[0].mxu0
        %550 = vmatprep.mubr.f32.mxu0 0.0
        %551 = vmatmul.mubr.f32.gmra.mrb[0].mxu0 %v429
        %v552 = vpop.f32.mrb[0].mxu0
        %v553 = vadd.f32 %v410, %v552
        %v554 = vpop.f32.mrb[0].mxu0
        %555 = vmatprep.mubr.f32.mxu0 0.0
        %556 = vmatmul.mubr.f32.gmra.mrb[0].mxu0 %v432
        %v557 = vpop.f32.mrb[0].mxu0
        %v558 = vadd.f32 %v410, %v557
        %v559 = vpop.f32.mrb[0].mxu0
        %560 = vmatprep.mubr.f32.mxu0 0.0
        %561 = vmatmul.mubr.f32.gmra.mrb[0].mxu0 %v435
        %v562 = vpop.f32.mrb[0].mxu0
        %v563 = vadd.f32 %v410, %v562
        %v564 = vpop.f32.mrb[0].mxu0
        %565 = vmatprep.mubr.f32.mxu0 0.0
        %566 = vmatmul.mubr.f32.gmra.mrb[0].mxu0 %v438
        %v567 = vpop.f32.mrb[0].mxu0
        %v568 = vadd.f32 %v410, %v567
        %v569 = vpop.f32.mrb[0].mxu0
        %570 = vmatprep.mubr.f32.mxu0 0.0
        %571 = vmatmul.mubr.f32.gmra.mrb[0].mxu0 %v441
        %v572 = vpop.f32.mrb[0].mxu0
        %v573 = vadd.f32 %v410, %v572
        %v574 = vpop.f32.mrb[0].mxu0
        %575 = vmatprep.mubr.f32.mxu0 0.0
        %576 = vmatmul.mubr.f32.gmra.mrb[0].mxu0 %v444
        %v577 = vpop.f32.mrb[0].mxu0
        %v578 = vadd.f32 %v410, %v577
        %v579 = vpop.f32.mrb[0].mxu0
        %580 = vmatprep.mubr.f32.mxu0 0.0
        %581 = vmatmul.mubr.f32.gmra.mrb[0].mxu0 %v447
        %v582 = vpop.f32.mrb[0].mxu0
        %v583 = vadd.f32 %v410, %v582
        %v584 = vpop.f32.mrb[0].mxu0
        %585 = vmatprep.mubr.f32.mxu0 0.0
        %586 = vmatmul.mubr.f32.gmra.mrb[0].mxu0 %v450
        %v587 = vpop.f32.mrb[0].mxu0
        %v588 = vadd.f32 %v410, %v587
        %v589 = vpop.f32.mrb[0].mxu0
        %590 = vmatprep.mubr.f32.mxu0 0.0
        %591 = vmatmul.mubr.f32.gmra.mrb[0].mxu0 %v453
        %v592 = vpop.f32.mrb[0].mxu0
        %v593 = vadd.f32 %v410, %v592
        %v594 = vpop.f32.mrb[0].mxu0
        %595 = vmatprep.mubr.f32.mxu0 0.0
        %596 = vmatmul.mubr.f32.gmra.mrb[0].mxu0 %v456
        %v597 = vpop.f32.mrb[0].mxu0
        %v598 = vadd.f32 %v410, %v597
        %v599 = vpop.f32.mrb[0].mxu0
        %600 = vmatprep.mubr.f32.mxu0 0.0
        %601 = vmatmul.mubr.f32.gmra.mrb[0].mxu0 %v459
        %v602 = vpop.f32.mrb[0].mxu0
        %v603 = vadd.f32 %v410, %v602
        %v604 = vpop.f32.mrb[0].mxu0
        %605 = vdwg.mxu0
        %v606 = vmax.f32 %v528, 0.0
        %v607 = vmax.f32 %v533, 0.0
        %v608 = vmax.f32 %v538, 0.0
        %v609 = vmax.f32 %v543, 0.0
        %v610 = vmax.f32 %v548, 0.0
        %v611 = vmax.f32 %v553, 0.0
        %v612 = vmax.f32 %v558, 0.0
        %v613 = vmax.f32 %v563, 0.0
        %v614 = vmax.f32 %v568, 0.0
        %v615 = vmax.f32 %v573, 0.0
        %v616 = vmax.f32 %v578, 0.0
        %v617 = vmax.f32 %v583, 0.0
        %v618 = vmax.f32 %v588, 0.0
        %v619 = vmax.f32 %v593, 0.0
        %v620 = vmax.f32 %v598, 0.0
        %v621 = vmax.f32 %v603, 0.0
        %v622 = vld [vmem:[%s3] sm:$0xff]
        %v623 = vld [vmem:[%s3 + $0x8] sm:$0xff]
        %v624 = vld [vmem:[%s3 + $0x10] sm:$0xff]
        %v625 = vld [vmem:[%s3 + $0x18] sm:$0xff]
        %v626 = vld [vmem:[%s4] sm:$0x1]
        %v628 = vlaneseq
        %v629 = vshrl.u32 %v628, 7
        %v630 = vsub.s32 0, %v629
        %v631 = vrot.slane %v626, %v630
        %vm633 = vcmask 261120
        %v635 = vsel %vm633, %v606, 0
        %v638 = vsel %vm633, %v607, 0
        %v641 = vsel %vm633, %v608, 0
        %v644 = vsel %vm633, %v609, 0
        %v647 = vsel %vm633, %v610, 0
        %v650 = vsel %vm633, %v611, 0
        %v653 = vsel %vm633, %v612, 0
        %v656 = vsel %vm633, %v613, 0
        %v659 = vsel %vm633, %v614, 0
        %v662 = vsel %vm633, %v615, 0
        %v665 = vsel %vm633, %v616, 0
        %v668 = vsel %vm633, %v617, 0
        %v671 = vsel %vm633, %v618, 0
        %v674 = vsel %vm633, %v619, 0
        %v677 = vsel %vm633, %v620, 0
        %v680 = vsel %vm633, %v621, 0
        %682 = vmatprep.subr.mxu0 0.0
        %683 = vmatpush1.msra.mxu0 %v622
        %684 = vmatprep.subr.mxu0 0.0
        %685 = vmatpush1.msra.mxu0 %v623
        %686 = vmatprep.subr.mxu0 0.0
        %687 = vmatpush1.msra.mxu0 %v624
        %688 = vmatprep.subr.mxu0 0.0
        %689 = vmatpush1.msra.mxu0 %v625
        %690 = vmatprep.subr.mxu0 0.0
        %691 = vmatpush1.msra.mxu0 0.0
        %692 = vmatprep.subr.mxu0 0.0
        %693 = vmatpush1.msra.mxu0 0.0
        %694 = vmatprep.subr.mxu0 0.0
        %695 = vmatpush1.msra.mxu0 0.0
        %696 = vmatprep.subr.mxu0 0.0
        %697 = vmatpush1.msra.mxu0 0.0
        %698 = vmatprep.subr.mxu0 0.0
        %699 = vmatpush1.msra.mxu0 0.0
        %700 = vmatprep.subr.mxu0 0.0
        %701 = vmatpush1.msra.mxu0 0.0
        %702 = vmatprep.subr.mxu0 0.0
        %703 = vmatpush1.msra.mxu0 0.0
        %704 = vmatprep.subr.mxu0 0.0
        %705 = vmatpush1.msra.mxu0 0.0
        %706 = vmatprep.subr.mxu0 0.0
        %707 = vmatpush1.msra.mxu0 0.0
        %708 = vmatprep.subr.mxu0 0.0
        %709 = vmatpush1.msra.mxu0 0.0
        %710 = vmatprep.subr.mxu0 0.0
        %711 = vmatpush1.msra.mxu0 0.0
        %712 = vmatprep.subr.mxu0 0.0
        %713 = vmatpush1.msra.mxu0 0.0
        %714 = vmatprep.subr.mxu0 0.0
        %715 = vmatpush1.msra.mxu0 0.0
        %716 = vmatprep.subr.mxu0 0.0
        %717 = vmatpush1.msra.mxu0 0.0
        %718 = vmatprep.subr.mxu0 0.0
        %719 = vmatpush1.msra.mxu0 0.0
        %720 = vmatprep.subr.mxu0 0.0
        %721 = vmatpush1.msra.mxu0 0.0
        %722 = vmatprep.subr.mxu0 0.0
        %723 = vmatpush1.msra.mxu0 0.0
        %724 = vmatprep.subr.mxu0 0.0
        %725 = vmatpush1.msra.mxu0 0.0
        %726 = vmatprep.subr.mxu0 0.0
        %727 = vmatpush1.msra.mxu0 0.0
        %728 = vmatprep.subr.mxu0 0.0
        %729 = vmatpush1.msra.mxu0 0.0
        %730 = vmatprep.subr.mxu0 0.0
        %731 = vmatpush1.msra.mxu0 0.0
        %732 = vmatprep.subr.mxu0 0.0
        %733 = vmatpush1.msra.mxu0 0.0
        %734 = vmatprep.subr.mxu0 0.0
        %735 = vmatpush1.msra.mxu0 0.0
        %736 = vmatprep.subr.mxu0 0.0
        %737 = vmatpush1.msra.mxu0 0.0
        %738 = vmatprep.subr.mxu0 0.0
        %739 = vmatpush1.msra.mxu0 0.0
        %740 = vmatprep.subr.mxu0 0.0
        %741 = vmatpush1.msra.mxu0 0.0
        %742 = vmatprep.subr.mxu0 0.0
        %743 = vmatpush1.msra.mxu0 0.0
        %744 = vmatprep.subr.mxu0 0.0
        %745 = vmatpush1.msra.mxu0 0.0
        %746 = vmatprep.mubr.f32.mxu0 0.0
        %747 = vmatmul.mubr.f32.gmra.mrb[0].mxu0 %v635
        %v748 = vpop.f32.mrb[0].mxu0
        %v749 = vadd.f32 %v631, %v748
        %v750 = vpop.f32.mrb[0].mxu0
        %751 = vmatprep.mubr.f32.mxu0 0.0
        %752 = vmatmul.mubr.f32.gmra.mrb[0].mxu0 %v638
        %v753 = vpop.f32.mrb[0].mxu0
        %v754 = vadd.f32 %v631, %v753
        %v755 = vpop.f32.mrb[0].mxu0
        %756 = vmatprep.mubr.f32.mxu0 0.0
        %757 = vmatmul.mubr.f32.gmra.mrb[0].mxu0 %v641
        %v758 = vpop.f32.mrb[0].mxu0
        %v759 = vadd.f32 %v631, %v758
        %v760 = vpop.f32.mrb[0].mxu0
        %761 = vmatprep.mubr.f32.mxu0 0.0
        %762 = vmatmul.mubr.f32.gmra.mrb[0].mxu0 %v644
        %v763 = vpop.f32.mrb[0].mxu0
        %v764 = vadd.f32 %v631, %v763
        %v765 = vpop.f32.mrb[0].mxu0
        %766 = vmatprep.mubr.f32.mxu0 0.0
        %767 = vmatmul.mubr.f32.gmra.mrb[0].mxu0 %v647
        %v768 = vpop.f32.mrb[0].mxu0
        %v769 = vadd.f32 %v631, %v768
        %v770 = vpop.f32.mrb[0].mxu0
        %771 = vmatprep.mubr.f32.mxu0 0.0
        %772 = vmatmul.mubr.f32.gmra.mrb[0].mxu0 %v650
        %v773 = vpop.f32.mrb[0].mxu0
        %v774 = vadd.f32 %v631, %v773
        %v775 = vpop.f32.mrb[0].mxu0
        %776 = vmatprep.mubr.f32.mxu0 0.0
        %777 = vmatmul.mubr.f32.gmra.mrb[0].mxu0 %v653
        %v778 = vpop.f32.mrb[0].mxu0
        %v779 = vadd.f32 %v631, %v778
        %v780 = vpop.f32.mrb[0].mxu0
        %781 = vmatprep.mubr.f32.mxu0 0.0
        %782 = vmatmul.mubr.f32.gmra.mrb[0].mxu0 %v656
        %v783 = vpop.f32.mrb[0].mxu0
        %v784 = vadd.f32 %v631, %v783
        %v785 = vpop.f32.mrb[0].mxu0
        %786 = vmatprep.mubr.f32.mxu0 0.0
        %787 = vmatmul.mubr.f32.gmra.mrb[0].mxu0 %v659
        %v788 = vpop.f32.mrb[0].mxu0
        %v789 = vadd.f32 %v631, %v788
        %v790 = vpop.f32.mrb[0].mxu0
        %791 = vmatprep.mubr.f32.mxu0 0.0
        %792 = vmatmul.mubr.f32.gmra.mrb[0].mxu0 %v662
        %v793 = vpop.f32.mrb[0].mxu0
        %v794 = vadd.f32 %v631, %v793
        %v795 = vpop.f32.mrb[0].mxu0
        %796 = vmatprep.mubr.f32.mxu0 0.0
        %797 = vmatmul.mubr.f32.gmra.mrb[0].mxu0 %v665
        %v798 = vpop.f32.mrb[0].mxu0
        %v799 = vadd.f32 %v631, %v798
        %v800 = vpop.f32.mrb[0].mxu0
        %801 = vmatprep.mubr.f32.mxu0 0.0
        %802 = vmatmul.mubr.f32.gmra.mrb[0].mxu0 %v668
        %v803 = vpop.f32.mrb[0].mxu0
        %v804 = vadd.f32 %v631, %v803
        %v805 = vpop.f32.mrb[0].mxu0
        %806 = vmatprep.mubr.f32.mxu0 0.0
        %807 = vmatmul.mubr.f32.gmra.mrb[0].mxu0 %v671
        %v808 = vpop.f32.mrb[0].mxu0
        %v809 = vadd.f32 %v631, %v808
        %v810 = vpop.f32.mrb[0].mxu0
        %811 = vmatprep.mubr.f32.mxu0 0.0
        %812 = vmatmul.mubr.f32.gmra.mrb[0].mxu0 %v674
        %v813 = vpop.f32.mrb[0].mxu0
        %v814 = vadd.f32 %v631, %v813
        %v815 = vpop.f32.mrb[0].mxu0
        %816 = vmatprep.mubr.f32.mxu0 0.0
        %817 = vmatmul.mubr.f32.gmra.mrb[0].mxu0 %v677
        %v818 = vpop.f32.mrb[0].mxu0
        %v819 = vadd.f32 %v631, %v818
        %v820 = vpop.f32.mrb[0].mxu0
        %821 = vmatprep.mubr.f32.mxu0 0.0
        %822 = vmatmul.mubr.f32.gmra.mrb[0].mxu0 %v680
        %v823 = vpop.f32.mrb[0].mxu0
        %v824 = vadd.f32 %v631, %v823
        %v825 = vpop.f32.mrb[0].mxu0
        %826 = vdwg.mxu0
        %v827 = vmax.f32 %v749, 0.0
        %v828 = vmax.f32 %v754, 0.0
        %v829 = vmax.f32 %v759, 0.0
        %v830 = vmax.f32 %v764, 0.0
        %v831 = vmax.f32 %v769, 0.0
        %v832 = vmax.f32 %v774, 0.0
        %v833 = vmax.f32 %v779, 0.0
        %v834 = vmax.f32 %v784, 0.0
        %v835 = vmax.f32 %v789, 0.0
        %v836 = vmax.f32 %v794, 0.0
        %v837 = vmax.f32 %v799, 0.0
        %v838 = vmax.f32 %v804, 0.0
        %v839 = vmax.f32 %v809, 0.0
        %v840 = vmax.f32 %v814, 0.0
        %v841 = vmax.f32 %v819, 0.0
        %v842 = vmax.f32 %v824, 0.0
        %v843 = vld [vmem:[%s5] sm:$0xff]
        %v844 = vld [vmem:[%s5 + $0x8] sm:$0xff]
        %v845 = vld [vmem:[%s5 + $0x10] sm:$0xff]
        %v846 = vld [vmem:[%s5 + $0x18] sm:$0xff]
        %v847 = vld [vmem:[%s6] sm:$0x1]
        %v849 = vlaneseq
        %v850 = vshrl.u32 %v849, 7
        %v851 = vsub.s32 0, %v850
        %v852 = vrot.slane %v847, %v851
        %v855 = vsel %vm633, %v827, 0
        %v858 = vsel %vm633, %v828, 0
        %v861 = vsel %vm633, %v829, 0
        %v864 = vsel %vm633, %v830, 0
        %v867 = vsel %vm633, %v831, 0
        %v870 = vsel %vm633, %v832, 0
        %v873 = vsel %vm633, %v833, 0
        %v876 = vsel %vm633, %v834, 0
        %v879 = vsel %vm633, %v835, 0
        %v882 = vsel %vm633, %v836, 0
        %v885 = vsel %vm633, %v837, 0
        %v888 = vsel %vm633, %v838, 0
        %v891 = vsel %vm633, %v839, 0
        %v894 = vsel %vm633, %v840, 0
        %v897 = vsel %vm633, %v841, 0
        %v900 = vsel %vm633, %v842, 0
        %902 = vmatprep.subr.mxu0 0.0
        %903 = vmatpush1.msra.mxu0 %v843
        %904 = vmatprep.subr.mxu0 0.0
        %905 = vmatpush1.msra.mxu0 %v844
        %906 = vmatprep.subr.mxu0 0.0
        %907 = vmatpush1.msra.mxu0 %v845
        %908 = vmatprep.subr.mxu0 0.0
        %909 = vmatpush1.msra.mxu0 %v846
        %910 = vmatprep.subr.mxu0 0.0
        %911 = vmatpush1.msra.mxu0 0.0
        %912 = vmatprep.subr.mxu0 0.0
        %913 = vmatpush1.msra.mxu0 0.0
        %914 = vmatprep.subr.mxu0 0.0
        %915 = vmatpush1.msra.mxu0 0.0
        %916 = vmatprep.subr.mxu0 0.0
        %917 = vmatpush1.msra.mxu0 0.0
        %918 = vmatprep.subr.mxu0 0.0
        %919 = vmatpush1.msra.mxu0 0.0
        %920 = vmatprep.subr.mxu0 0.0
        %921 = vmatpush1.msra.mxu0 0.0
        %922 = vmatprep.subr.mxu0 0.0
        %923 = vmatpush1.msra.mxu0 0.0
        %924 = vmatprep.subr.mxu0 0.0
        %925 = vmatpush1.msra.mxu0 0.0
        %926 = vmatprep.subr.mxu0 0.0
        %927 = vmatpush1.msra.mxu0 0.0
        %928 = vmatprep.subr.mxu0 0.0
        %929 = vmatpush1.msra.mxu0 0.0
        %930 = vmatprep.subr.mxu0 0.0
        %931 = vmatpush1.msra.mxu0 0.0
        %932 = vmatprep.subr.mxu0 0.0
        %933 = vmatpush1.msra.mxu0 0.0
        %934 = vmatprep.subr.mxu0 0.0
        %935 = vmatpush1.msra.mxu0 0.0
        %936 = vmatprep.subr.mxu0 0.0
        %937 = vmatpush1.msra.mxu0 0.0
        %938 = vmatprep.subr.mxu0 0.0
        %939 = vmatpush1.msra.mxu0 0.0
        %940 = vmatprep.subr.mxu0 0.0
        %941 = vmatpush1.msra.mxu0 0.0
        %942 = vmatprep.subr.mxu0 0.0
        %943 = vmatpush1.msra.mxu0 0.0
        %944 = vmatprep.subr.mxu0 0.0
        %945 = vmatpush1.msra.mxu0 0.0
        %946 = vmatprep.subr.mxu0 0.0
        %947 = vmatpush1.msra.mxu0 0.0
        %948 = vmatprep.subr.mxu0 0.0
        %949 = vmatpush1.msra.mxu0 0.0
        %950 = vmatprep.subr.mxu0 0.0
        %951 = vmatpush1.msra.mxu0 0.0
        %952 = vmatprep.subr.mxu0 0.0
        %953 = vmatpush1.msra.mxu0 0.0
        %954 = vmatprep.subr.mxu0 0.0
        %955 = vmatpush1.msra.mxu0 0.0
        %956 = vmatprep.subr.mxu0 0.0
        %957 = vmatpush1.msra.mxu0 0.0
        %958 = vmatprep.subr.mxu0 0.0
        %959 = vmatpush1.msra.mxu0 0.0
        %960 = vmatprep.subr.mxu0 0.0
        %961 = vmatpush1.msra.mxu0 0.0
        %962 = vmatprep.subr.mxu0 0.0
        %963 = vmatpush1.msra.mxu0 0.0
        %964 = vmatprep.subr.mxu0 0.0
        %965 = vmatpush1.msra.mxu0 0.0
        %966 = vmatprep.mubr.f32.mxu0 0.0
        %967 = vmatmul.mubr.f32.gmra.mrb[0].mxu0 %v855
        %v968 = vpop.f32.mrb[0].mxu0
        %v969 = vadd.f32 %v852, %v968
        %v970 = vpop.f32.mrb[0].mxu0
        %971 = vmatprep.mubr.f32.mxu0 0.0
        %972 = vmatmul.mubr.f32.gmra.mrb[0].mxu0 %v858
        %v973 = vpop.f32.mrb[0].mxu0
        %v974 = vadd.f32 %v852, %v973
        %v975 = vpop.f32.mrb[0].mxu0
        %976 = vmatprep.mubr.f32.mxu0 0.0
        %977 = vmatmul.mubr.f32.gmra.mrb[0].mxu0 %v861
        %v978 = vpop.f32.mrb[0].mxu0
        %v979 = vadd.f32 %v852, %v978
        %v980 = vpop.f32.mrb[0].mxu0
        %981 = vmatprep.mubr.f32.mxu0 0.0
        %982 = vmatmul.mubr.f32.gmra.mrb[0].mxu0 %v864
        %v983 = vpop.f32.mrb[0].mxu0
        %v984 = vadd.f32 %v852, %v983
        %v985 = vpop.f32.mrb[0].mxu0
        %986 = vmatprep.mubr.f32.mxu0 0.0
        %987 = vmatmul.mubr.f32.gmra.mrb[0].mxu0 %v867
        %v988 = vpop.f32.mrb[0].mxu0
        %v989 = vadd.f32 %v852, %v988
        %v990 = vpop.f32.mrb[0].mxu0
        %991 = vmatprep.mubr.f32.mxu0 0.0
        %992 = vmatmul.mubr.f32.gmra.mrb[0].mxu0 %v870
        %v993 = vpop.f32.mrb[0].mxu0
        %v994 = vadd.f32 %v852, %v993
        %v995 = vpop.f32.mrb[0].mxu0
        %996 = vmatprep.mubr.f32.mxu0 0.0
        %997 = vmatmul.mubr.f32.gmra.mrb[0].mxu0 %v873
        %v998 = vpop.f32.mrb[0].mxu0
        %v999 = vadd.f32 %v852, %v998
        %v1000 = vpop.f32.mrb[0].mxu0
        %1001 = vmatprep.mubr.f32.mxu0 0.0
        %1002 = vmatmul.mubr.f32.gmra.mrb[0].mxu0 %v876
        %v1003 = vpop.f32.mrb[0].mxu0
        %v1004 = vadd.f32 %v852, %v1003
        %v1005 = vpop.f32.mrb[0].mxu0
        %1006 = vmatprep.mubr.f32.mxu0 0.0
        %1007 = vmatmul.mubr.f32.gmra.mrb[0].mxu0 %v879
        %v1008 = vpop.f32.mrb[0].mxu0
        %v1009 = vadd.f32 %v852, %v1008
        %v1010 = vpop.f32.mrb[0].mxu0
        %1011 = vmatprep.mubr.f32.mxu0 0.0
        %1012 = vmatmul.mubr.f32.gmra.mrb[0].mxu0 %v882
        %v1013 = vpop.f32.mrb[0].mxu0
        %v1014 = vadd.f32 %v852, %v1013
        %v1015 = vpop.f32.mrb[0].mxu0
        %1016 = vmatprep.mubr.f32.mxu0 0.0
        %1017 = vmatmul.mubr.f32.gmra.mrb[0].mxu0 %v885
        %v1018 = vpop.f32.mrb[0].mxu0
        %v1019 = vadd.f32 %v852, %v1018
        %v1020 = vpop.f32.mrb[0].mxu0
        %1021 = vmatprep.mubr.f32.mxu0 0.0
        %1022 = vmatmul.mubr.f32.gmra.mrb[0].mxu0 %v888
        %v1023 = vpop.f32.mrb[0].mxu0
        %v1024 = vadd.f32 %v852, %v1023
        %v1025 = vpop.f32.mrb[0].mxu0
        %1026 = vmatprep.mubr.f32.mxu0 0.0
        %1027 = vmatmul.mubr.f32.gmra.mrb[0].mxu0 %v891
        %v1028 = vpop.f32.mrb[0].mxu0
        %v1029 = vadd.f32 %v852, %v1028
        %v1030 = vpop.f32.mrb[0].mxu0
        %1031 = vmatprep.mubr.f32.mxu0 0.0
        %1032 = vmatmul.mubr.f32.gmra.mrb[0].mxu0 %v894
        %v1033 = vpop.f32.mrb[0].mxu0
        %v1034 = vadd.f32 %v852, %v1033
        %v1035 = vpop.f32.mrb[0].mxu0
        %1036 = vmatprep.mubr.f32.mxu0 0.0
        %1037 = vmatmul.mubr.f32.gmra.mrb[0].mxu0 %v897
        %v1038 = vpop.f32.mrb[0].mxu0
        %v1039 = vadd.f32 %v852, %v1038
        %v1040 = vpop.f32.mrb[0].mxu0
        %1041 = vmatprep.mubr.f32.mxu0 0.0
        %1042 = vmatmul.mubr.f32.gmra.mrb[0].mxu0 %v900
        %v1043 = vpop.f32.mrb[0].mxu0
        %v1044 = vadd.f32 %v852, %v1043
        %v1045 = vpop.f32.mrb[0].mxu0
        %1046 = vdwg.mxu0
        %v1047 = vmax.f32 %v969, 0.0
        %v1048 = vmax.f32 %v974, 0.0
        %v1049 = vmax.f32 %v979, 0.0
        %v1050 = vmax.f32 %v984, 0.0
        %v1051 = vmax.f32 %v989, 0.0
        %v1052 = vmax.f32 %v994, 0.0
        %v1053 = vmax.f32 %v999, 0.0
        %v1054 = vmax.f32 %v1004, 0.0
        %v1055 = vmax.f32 %v1009, 0.0
        %v1056 = vmax.f32 %v1014, 0.0
        %v1057 = vmax.f32 %v1019, 0.0
        %v1058 = vmax.f32 %v1024, 0.0
        %v1059 = vmax.f32 %v1029, 0.0
        %v1060 = vmax.f32 %v1034, 0.0
        %v1061 = vmax.f32 %v1039, 0.0
        %v1062 = vmax.f32 %v1044, 0.0
        %v1063 = vld [vmem:[%s7] sm:$0xff]
        %v1064 = vld [vmem:[%s7 + $0x8] sm:$0xff]
        %v1065 = vld [vmem:[%s7 + $0x10] sm:$0xff]
        %v1066 = vld [vmem:[%s7 + $0x18] sm:$0xff]
        %v1067 = vld [vmem:[%s8] sm:$0x1]
        %v1069 = vlaneseq
        %v1070 = vshrl.u32 %v1069, 7
        %v1071 = vsub.s32 0, %v1070
        %v1072 = vrot.slane %v1067, %v1071
        %v1075 = vsel %vm633, %v1047, 0
        %v1078 = vsel %vm633, %v1048, 0
        %v1081 = vsel %vm633, %v1049, 0
        %v1084 = vsel %vm633, %v1050, 0
        %v1087 = vsel %vm633, %v1051, 0
        %v1090 = vsel %vm633, %v1052, 0
        %v1093 = vsel %vm633, %v1053, 0
        %v1096 = vsel %vm633, %v1054, 0
        %v1099 = vsel %vm633, %v1055, 0
        %v1102 = vsel %vm633, %v1056, 0
        %v1105 = vsel %vm633, %v1057, 0
        %v1108 = vsel %vm633, %v1058, 0
        %v1111 = vsel %vm633, %v1059, 0
        %v1114 = vsel %vm633, %v1060, 0
        %v1117 = vsel %vm633, %v1061, 0
        %v1120 = vsel %vm633, %v1062, 0
        %1122 = vmatprep.subr.mxu0 0.0
        %1123 = vmatpush1.msra.mxu0 %v1063
        %1124 = vmatprep.subr.mxu0 0.0
        %1125 = vmatpush1.msra.mxu0 %v1064
        %1126 = vmatprep.subr.mxu0 0.0
        %1127 = vmatpush1.msra.mxu0 %v1065
        %1128 = vmatprep.subr.mxu0 0.0
        %1129 = vmatpush1.msra.mxu0 %v1066
        %1130 = vmatprep.subr.mxu0 0.0
        %1131 = vmatpush1.msra.mxu0 0.0
        %1132 = vmatprep.subr.mxu0 0.0
        %1133 = vmatpush1.msra.mxu0 0.0
        %1134 = vmatprep.subr.mxu0 0.0
        %1135 = vmatpush1.msra.mxu0 0.0
        %1136 = vmatprep.subr.mxu0 0.0
        %1137 = vmatpush1.msra.mxu0 0.0
        %1138 = vmatprep.subr.mxu0 0.0
        %1139 = vmatpush1.msra.mxu0 0.0
        %1140 = vmatprep.subr.mxu0 0.0
        %1141 = vmatpush1.msra.mxu0 0.0
        %1142 = vmatprep.subr.mxu0 0.0
        %1143 = vmatpush1.msra.mxu0 0.0
        %1144 = vmatprep.subr.mxu0 0.0
        %1145 = vmatpush1.msra.mxu0 0.0
        %1146 = vmatprep.subr.mxu0 0.0
        %1147 = vmatpush1.msra.mxu0 0.0
        %1148 = vmatprep.subr.mxu0 0.0
        %1149 = vmatpush1.msra.mxu0 0.0
        %1150 = vmatprep.subr.mxu0 0.0
        %1151 = vmatpush1.msra.mxu0 0.0
        %1152 = vmatprep.subr.mxu0 0.0
        %1153 = vmatpush1.msra.mxu0 0.0
        %1154 = vmatprep.subr.mxu0 0.0
        %1155 = vmatpush1.msra.mxu0 0.0
        %1156 = vmatprep.subr.mxu0 0.0
        %1157 = vmatpush1.msra.mxu0 0.0
        %1158 = vmatprep.subr.mxu0 0.0
        %1159 = vmatpush1.msra.mxu0 0.0
        %1160 = vmatprep.subr.mxu0 0.0
        %1161 = vmatpush1.msra.mxu0 0.0
        %1162 = vmatprep.subr.mxu0 0.0
        %1163 = vmatpush1.msra.mxu0 0.0
        %1164 = vmatprep.subr.mxu0 0.0
        %1165 = vmatpush1.msra.mxu0 0.0
        %1166 = vmatprep.subr.mxu0 0.0
        %1167 = vmatpush1.msra.mxu0 0.0
        %1168 = vmatprep.subr.mxu0 0.0
        %1169 = vmatpush1.msra.mxu0 0.0
        %1170 = vmatprep.subr.mxu0 0.0
        %1171 = vmatpush1.msra.mxu0 0.0
        %1172 = vmatprep.subr.mxu0 0.0
        %1173 = vmatpush1.msra.mxu0 0.0
        %1174 = vmatprep.subr.mxu0 0.0
        %1175 = vmatpush1.msra.mxu0 0.0
        %1176 = vmatprep.subr.mxu0 0.0
        %1177 = vmatpush1.msra.mxu0 0.0
        %1178 = vmatprep.subr.mxu0 0.0
        %1179 = vmatpush1.msra.mxu0 0.0
        %1180 = vmatprep.subr.mxu0 0.0
        %1181 = vmatpush1.msra.mxu0 0.0
        %1182 = vmatprep.subr.mxu0 0.0
        %1183 = vmatpush1.msra.mxu0 0.0
        %1184 = vmatprep.subr.mxu0 0.0
        %1185 = vmatpush1.msra.mxu0 0.0
        %1186 = vmatprep.mubr.f32.mxu0 0.0
        %1187 = vmatmul.mubr.f32.gmra.mrb[0].mxu0 %v1075
        %v1188 = vpop.f32.mrb[0].mxu0
        %v1189 = vadd.f32 %v1072, %v1188
        %v1190 = vpop.f32.mrb[0].mxu0
        %1191 = vmatprep.mubr.f32.mxu0 0.0
        %1192 = vmatmul.mubr.f32.gmra.mrb[0].mxu0 %v1078
        %v1193 = vpop.f32.mrb[0].mxu0
        %v1194 = vadd.f32 %v1072, %v1193
        %v1195 = vpop.f32.mrb[0].mxu0
        %1196 = vmatprep.mubr.f32.mxu0 0.0
        %1197 = vmatmul.mubr.f32.gmra.mrb[0].mxu0 %v1081
        %v1198 = vpop.f32.mrb[0].mxu0
        %v1199 = vadd.f32 %v1072, %v1198
        %v1200 = vpop.f32.mrb[0].mxu0
        %1201 = vmatprep.mubr.f32.mxu0 0.0
        %1202 = vmatmul.mubr.f32.gmra.mrb[0].mxu0 %v1084
        %v1203 = vpop.f32.mrb[0].mxu0
        %v1204 = vadd.f32 %v1072, %v1203
        %v1205 = vpop.f32.mrb[0].mxu0
        %1206 = vmatprep.mubr.f32.mxu0 0.0
        %1207 = vmatmul.mubr.f32.gmra.mrb[0].mxu0 %v1087
        %v1208 = vpop.f32.mrb[0].mxu0
        %v1209 = vadd.f32 %v1072, %v1208
        %v1210 = vpop.f32.mrb[0].mxu0
        %1211 = vmatprep.mubr.f32.mxu0 0.0
        %1212 = vmatmul.mubr.f32.gmra.mrb[0].mxu0 %v1090
        %v1213 = vpop.f32.mrb[0].mxu0
        %v1214 = vadd.f32 %v1072, %v1213
        %v1215 = vpop.f32.mrb[0].mxu0
        %1216 = vmatprep.mubr.f32.mxu0 0.0
        %1217 = vmatmul.mubr.f32.gmra.mrb[0].mxu0 %v1093
        %v1218 = vpop.f32.mrb[0].mxu0
        %v1219 = vadd.f32 %v1072, %v1218
        %v1220 = vpop.f32.mrb[0].mxu0
        %1221 = vmatprep.mubr.f32.mxu0 0.0
        %1222 = vmatmul.mubr.f32.gmra.mrb[0].mxu0 %v1096
        %v1223 = vpop.f32.mrb[0].mxu0
        %v1224 = vadd.f32 %v1072, %v1223
        %v1225 = vpop.f32.mrb[0].mxu0
        %1226 = vmatprep.mubr.f32.mxu0 0.0
        %1227 = vmatmul.mubr.f32.gmra.mrb[0].mxu0 %v1099
        %v1228 = vpop.f32.mrb[0].mxu0
        %v1229 = vadd.f32 %v1072, %v1228
        %v1230 = vpop.f32.mrb[0].mxu0
        %1231 = vmatprep.mubr.f32.mxu0 0.0
        %1232 = vmatmul.mubr.f32.gmra.mrb[0].mxu0 %v1102
        %v1233 = vpop.f32.mrb[0].mxu0
        %v1234 = vadd.f32 %v1072, %v1233
        %v1235 = vpop.f32.mrb[0].mxu0
        %1236 = vmatprep.mubr.f32.mxu0 0.0
        %1237 = vmatmul.mubr.f32.gmra.mrb[0].mxu0 %v1105
        %v1238 = vpop.f32.mrb[0].mxu0
        %v1239 = vadd.f32 %v1072, %v1238
        %v1240 = vpop.f32.mrb[0].mxu0
        %1241 = vmatprep.mubr.f32.mxu0 0.0
        %1242 = vmatmul.mubr.f32.gmra.mrb[0].mxu0 %v1108
        %v1243 = vpop.f32.mrb[0].mxu0
        %v1244 = vadd.f32 %v1072, %v1243
        %v1245 = vpop.f32.mrb[0].mxu0
        %1246 = vmatprep.mubr.f32.mxu0 0.0
        %1247 = vmatmul.mubr.f32.gmra.mrb[0].mxu0 %v1111
        %v1248 = vpop.f32.mrb[0].mxu0
        %v1249 = vadd.f32 %v1072, %v1248
        %v1250 = vpop.f32.mrb[0].mxu0
        %1251 = vmatprep.mubr.f32.mxu0 0.0
        %1252 = vmatmul.mubr.f32.gmra.mrb[0].mxu0 %v1114
        %v1253 = vpop.f32.mrb[0].mxu0
        %v1254 = vadd.f32 %v1072, %v1253
        %v1255 = vpop.f32.mrb[0].mxu0
        %1256 = vmatprep.mubr.f32.mxu0 0.0
        %1257 = vmatmul.mubr.f32.gmra.mrb[0].mxu0 %v1117
        %v1258 = vpop.f32.mrb[0].mxu0
        %v1259 = vadd.f32 %v1072, %v1258
        %v1260 = vpop.f32.mrb[0].mxu0
        %1261 = vmatprep.mubr.f32.mxu0 0.0
        %1262 = vmatmul.mubr.f32.gmra.mrb[0].mxu0 %v1120
        %v1263 = vpop.f32.mrb[0].mxu0
        %v1264 = vadd.f32 %v1072, %v1263
        %v1265 = vpop.f32.mrb[0].mxu0
        %1266 = vdwg.mxu0
        %v1267 = vmax.f32 %v1189, 0.0
        %v1268 = vmax.f32 %v1194, 0.0
        %v1269 = vmax.f32 %v1199, 0.0
        %v1270 = vmax.f32 %v1204, 0.0
        %v1271 = vmax.f32 %v1209, 0.0
        %v1272 = vmax.f32 %v1214, 0.0
        %v1273 = vmax.f32 %v1219, 0.0
        %v1274 = vmax.f32 %v1224, 0.0
        %v1275 = vmax.f32 %v1229, 0.0
        %v1276 = vmax.f32 %v1234, 0.0
        %v1277 = vmax.f32 %v1239, 0.0
        %v1278 = vmax.f32 %v1244, 0.0
        %v1279 = vmax.f32 %v1249, 0.0
        %v1280 = vmax.f32 %v1254, 0.0
        %v1281 = vmax.f32 %v1259, 0.0
        %v1282 = vmax.f32 %v1264, 0.0
        %v1283 = vld [vmem:[%s9] sm:$0x1]
        %v1285 = vlaneseq
        %v1286 = vshrl.u32 %v1285, 7
        %v1287 = vsub.s32 0, %v1286
        %v1288 = vrot.slane %v1283, %v1287
        %v1290 = vmul.f32 %v1267, %v1288
        %v1291 = vmul.f32 %v1268, %v1288
        %v1292 = vmul.f32 %v1269, %v1288
        %v1293 = vmul.f32 %v1270, %v1288
        %v1294 = vmul.f32 %v1271, %v1288
        %v1295 = vmul.f32 %v1272, %v1288
        %v1296 = vmul.f32 %v1273, %v1288
        %v1297 = vmul.f32 %v1274, %v1288
        %v1298 = vmul.f32 %v1275, %v1288
        %v1299 = vmul.f32 %v1276, %v1288
        %v1300 = vmul.f32 %v1277, %v1288
        %v1301 = vmul.f32 %v1278, %v1288
        %v1302 = vmul.f32 %v1279, %v1288
        %v1303 = vmul.f32 %v1280, %v1288
        %v1304 = vmul.f32 %v1281, %v1288
        %v1305 = vmul.f32 %v1282, %v1288
        %v1306 = vsel %vm633, %v1290, 0.0
        %1307 = vadd.xlane.f32.xlu0 %v1306
        %v1308 = vpop.xlane.xlu0 %1307
        %v1309 = vsel %vm633, %v1291, 0.0
        %1310 = vadd.xlane.f32.xlu0 %v1309
        %v1311 = vpop.xlane.xlu0 %1310
        %v1312 = vsel %vm633, %v1292, 0.0
        %1313 = vadd.xlane.f32.xlu0 %v1312
        %v1314 = vpop.xlane.xlu0 %1313
        %v1315 = vsel %vm633, %v1293, 0.0
        %1316 = vadd.xlane.f32.xlu0 %v1315
        %v1317 = vpop.xlane.xlu0 %1316
        %v1318 = vsel %vm633, %v1294, 0.0
        %1319 = vadd.xlane.f32.xlu0 %v1318
        %v1320 = vpop.xlane.xlu0 %1319
        %v1321 = vsel %vm633, %v1295, 0.0
        %1322 = vadd.xlane.f32.xlu0 %v1321
        %v1323 = vpop.xlane.xlu0 %1322
        %v1324 = vsel %vm633, %v1296, 0.0
        %1325 = vadd.xlane.f32.xlu0 %v1324
        %v1326 = vpop.xlane.xlu0 %1325
        %v1327 = vsel %vm633, %v1297, 0.0
        %1328 = vadd.xlane.f32.xlu0 %v1327
        %v1329 = vpop.xlane.xlu0 %1328
        %v1330 = vsel %vm633, %v1298, 0.0
        %1331 = vadd.xlane.f32.xlu0 %v1330
        %v1332 = vpop.xlane.xlu0 %1331
        %v1333 = vsel %vm633, %v1299, 0.0
        %1334 = vadd.xlane.f32.xlu0 %v1333
        %v1335 = vpop.xlane.xlu0 %1334
        %v1336 = vsel %vm633, %v1300, 0.0
        %1337 = vadd.xlane.f32.xlu0 %v1336
        %v1338 = vpop.xlane.xlu0 %1337
        %v1339 = vsel %vm633, %v1301, 0.0
        %1340 = vadd.xlane.f32.xlu0 %v1339
        %v1341 = vpop.xlane.xlu0 %1340
        %v1342 = vsel %vm633, %v1302, 0.0
        %1343 = vadd.xlane.f32.xlu0 %v1342
        %v1344 = vpop.xlane.xlu0 %1343
        %v1345 = vsel %vm633, %v1303, 0.0
        %1346 = vadd.xlane.f32.xlu0 %v1345
        %v1347 = vpop.xlane.xlu0 %1346
        %v1348 = vsel %vm633, %v1304, 0.0
        %1349 = vadd.xlane.f32.xlu0 %v1348
        %v1350 = vpop.xlane.xlu0 %1349
        %v1351 = vsel %vm633, %v1305, 0.0
        %1352 = vadd.xlane.f32.xlu0 %v1351
        %v1353 = vpop.xlane.xlu0 %1352
        %s1354 = sld [smem:[#allocation2]]
        %v1355 = vstv %s1354
        %v1356 = vadd.f32 %v1308, %v1355
        %v1357 = vadd.f32 %v1311, %v1355
        %v1358 = vadd.f32 %v1314, %v1355
        %v1359 = vadd.f32 %v1317, %v1355
        %v1360 = vadd.f32 %v1320, %v1355
        %v1361 = vadd.f32 %v1323, %v1355
        %v1362 = vadd.f32 %v1326, %v1355
        %v1363 = vadd.f32 %v1329, %v1355
        %v1364 = vadd.f32 %v1332, %v1355
        %v1365 = vadd.f32 %v1335, %v1355
        %v1366 = vadd.f32 %v1338, %v1355
        %v1367 = vadd.f32 %v1341, %v1355
        %v1368 = vadd.f32 %v1344, %v1355
        %v1369 = vadd.f32 %v1347, %v1355
        %v1370 = vadd.f32 %v1350, %v1355
        %v1371 = vadd.f32 %v1353, %v1355
        %v1372 = vmax.f32 %v1356, -1.0
        %v1373 = vmax.f32 %v1357, -1.0
        %v1374 = vmax.f32 %v1358, -1.0
        %v1375 = vmax.f32 %v1359, -1.0
        %v1376 = vmax.f32 %v1360, -1.0
        %v1377 = vmax.f32 %v1361, -1.0
        %v1378 = vmax.f32 %v1362, -1.0
        %v1379 = vmax.f32 %v1363, -1.0
        %v1380 = vmax.f32 %v1364, -1.0
        %v1381 = vmax.f32 %v1365, -1.0
        %v1382 = vmax.f32 %v1366, -1.0
        %v1383 = vmax.f32 %v1367, -1.0
        %v1384 = vmax.f32 %v1368, -1.0
        %v1385 = vmax.f32 %v1369, -1.0
        %v1386 = vmax.f32 %v1370, -1.0
        %v1387 = vmax.f32 %v1371, -1.0
        %v1388 = vmin.f32 %v1372, 1.0
        %v1389 = vmin.f32 %v1373, 1.0
        %v1390 = vmin.f32 %v1374, 1.0
        %v1391 = vmin.f32 %v1375, 1.0
        %v1392 = vmin.f32 %v1376, 1.0
        %v1393 = vmin.f32 %v1377, 1.0
        %v1394 = vmin.f32 %v1378, 1.0
        %v1395 = vmin.f32 %v1379, 1.0
        %v1396 = vmin.f32 %v1380, 1.0
        %v1397 = vmin.f32 %v1381, 1.0
        %v1398 = vmin.f32 %v1382, 1.0
        %v1399 = vmin.f32 %v1383, 1.0
        %v1400 = vmin.f32 %v1384, 1.0
        %v1401 = vmin.f32 %v1385, 1.0
        %v1402 = vmin.f32 %v1386, 1.0
        %v1403 = vmin.f32 %v1387, 1.0
        %v1420 = vlaneseq
        %v1421 = vand.u32 %v1420, 127
        %v1422 = vlaneseq
        %v1423 = vshrl.u32 %v1422, 7
        %v1424 = vsub.s32 %v1421, %v1423
        %v1425 = vrot.slane %v1388, %v1424
        %v1426 = vadd.s32 %v1421, 4294967288
        %v1427 = vlaneseq
        %v1428 = vshrl.u32 %v1427, 7
        %v1429 = vsub.s32 %v1426, %v1428
        %v1430 = vrot.slane %v1389, %v1429
        %vm1431 = vcmask 130112
        %v1432 = vsel %vm1431, %v1430, %v1425
        %v1433 = vadd.s32 %v1421, 4294967280
        %v1434 = vlaneseq
        %v1435 = vshrl.u32 %v1434, 7
        %v1436 = vsub.s32 %v1433, %v1435
        %v1437 = vrot.slane %v1390, %v1436
        %vm1438 = vcmask 195712
        %v1439 = vsel %vm1438, %v1437, %v1432
        %v1440 = vadd.s32 %v1421, 4294967272
        %v1441 = vlaneseq
        %v1442 = vshrl.u32 %v1441, 7
        %v1443 = vsub.s32 %v1440, %v1442
        %v1444 = vrot.slane %v1391, %v1443
        %vm1445 = vcmask 261312
        %v1446 = vsel %vm1445, %v1444, %v1439
        %v1447 = vadd.s32 %v1421, 4294967264
        %v1448 = vlaneseq
        %v1449 = vshrl.u32 %v1448, 7
        %v1450 = vsub.s32 %v1447, %v1449
        %v1451 = vrot.slane %v1392, %v1450
        %vm1452 = vcmask 326912
        %v1453 = vsel %vm1452, %v1451, %v1446
        %v1454 = vadd.s32 %v1421, 4294967256
        %v1455 = vlaneseq
        %v1456 = vshrl.u32 %v1455, 7
        %v1457 = vsub.s32 %v1454, %v1456
        %v1458 = vrot.slane %v1393, %v1457
        %vm1459 = vcmask 392512
        %v1460 = vsel %vm1459, %v1458, %v1453
        %v1461 = vadd.s32 %v1421, 4294967248
        %v1462 = vlaneseq
        %v1463 = vshrl.u32 %v1462, 7
        %v1464 = vsub.s32 %v1461, %v1463
        %v1465 = vrot.slane %v1394, %v1464
        %vm1466 = vcmask 458112
        %v1467 = vsel %vm1466, %v1465, %v1460
        %v1468 = vadd.s32 %v1421, 4294967240
        %v1469 = vlaneseq
        %v1470 = vshrl.u32 %v1469, 7
        %v1471 = vsub.s32 %v1468, %v1470
        %v1472 = vrot.slane %v1395, %v1471
        %vm1473 = vcmask 523712
        %v1474 = vsel %vm1473, %v1472, %v1467
        %v1475 = vadd.s32 %v1421, 4294967232
        %v1476 = vlaneseq
        %v1477 = vshrl.u32 %v1476, 7
        %v1478 = vsub.s32 %v1475, %v1477
        %v1479 = vrot.slane %v1396, %v1478
        %vm1480 = vcmask 589312
        %v1481 = vsel %vm1480, %v1479, %v1474
        %v1482 = vadd.s32 %v1421, 4294967224
        %v1483 = vlaneseq
        %v1484 = vshrl.u32 %v1483, 7
        %v1485 = vsub.s32 %v1482, %v1484
        %v1486 = vrot.slane %v1397, %v1485
        %vm1487 = vcmask 654912
        %v1488 = vsel %vm1487, %v1486, %v1481
        %v1489 = vadd.s32 %v1421, 4294967216
        %v1490 = vlaneseq
        %v1491 = vshrl.u32 %v1490, 7
        %v1492 = vsub.s32 %v1489, %v1491
        %v1493 = vrot.slane %v1398, %v1492
        %vm1494 = vcmask 720512
        %v1495 = vsel %vm1494, %v1493, %v1488
        %v1496 = vadd.s32 %v1421, 4294967208
        %v1497 = vlaneseq
        %v1498 = vshrl.u32 %v1497, 7
        %v1499 = vsub.s32 %v1496, %v1498
        %v1500 = vrot.slane %v1399, %v1499
        %vm1501 = vcmask 786112
        %v1502 = vsel %vm1501, %v1500, %v1495
        %v1503 = vadd.s32 %v1421, 4294967200
        %v1504 = vlaneseq
        %v1505 = vshrl.u32 %v1504, 7
        %v1506 = vsub.s32 %v1503, %v1505
        %v1507 = vrot.slane %v1400, %v1506
        %vm1508 = vcmask 851712
        %v1509 = vsel %vm1508, %v1507, %v1502
        %v1510 = vadd.s32 %v1421, 4294967192
        %v1511 = vlaneseq
        %v1512 = vshrl.u32 %v1511, 7
        %v1513 = vsub.s32 %v1510, %v1512
        %v1514 = vrot.slane %v1401, %v1513
        %vm1515 = vcmask 917312
        %v1516 = vsel %vm1515, %v1514, %v1509
        %v1517 = vadd.s32 %v1421, 4294967184
        %v1518 = vlaneseq
        %v1519 = vshrl.u32 %v1518, 7
        %v1520 = vsub.s32 %v1517, %v1519
        %v1521 = vrot.slane %v1402, %v1520
        %vm1522 = vcmask 982912
        %v1523 = vsel %vm1522, %v1521, %v1516
        %v1524 = vadd.s32 %v1421, 4294967176
        %v1525 = vlaneseq
        %v1526 = vshrl.u32 %v1525, 7
        %v1527 = vsub.s32 %v1524, %v1526
        %v1528 = vrot.slane %v1403, %v1527
        %vm1529 = vcmask 1048512
        %v1530 = vsel %vm1529, %v1528, %v1523
        %1532 = vst [vmem:[%s380] sm:$0x1] %v1530
        %s1533 = sand.u32 %s270, 1
        %s1534 = scalar_lea.sflag [#allocation4], %s1533
        %s1535 = sand.u32 %s270, 1
        %s1536 = scalar_lea.vmem [#allocation3], %s1535
        // Predicated region
        $region65: #{tpu_custom_call.1} parent=63 // pred_check
          %p1537 = pneg %p280
        $region66: #{tpu_custom_call.1} parent=63 // pred_check_branch
          %1539 = sbr.rel (%p1537) target = $region68
        $region67: #{tpu_custom_call.1} parent=63 // pred_region
          %s1541 = ssub.s32 16, 16
          %1542 = vsyncadd %s1534, %s1541
          %s1543 = smul.addr %s26, 16
          %s1544 = scalar_lea.hbm %s11, %s1543
          %s1546 = sshll.u32 %s1536, 4
          %s1547 = int_to_ptr.vmem [resolvable:$true] %s1546
          %1549 = dma.vmem_to_hbm [thread:$0]  %s1547, 16, %s1544, %s1534
        $region68: #{tpu_custom_call.1} parent=63 // pred_fallthru
          _
      $region64: #{tpu_custom_call.1} parent=5 // pred_fallthru
        _
      %p1550 = scmp.le.s32.totalorder 2, %s21
      // Predicated region
      $region69: #{tpu_custom_call.1} parent=5 // pred_check
        %p1551 = pneg %p1550
      $region70: #{tpu_custom_call.1} parent=5 // pred_check_branch
        %1553 = sbr.rel (%p1551) target = $region72
      $region71: #{tpu_custom_call.1} parent=5 // pred_region
        %s1554 = ssub.s32 %s21, 2
        // Predicated region
        $region73: #{tpu_custom_call.1} parent=71 // pred_check
          %p1555 = pneg %p286
        $region74: #{tpu_custom_call.1} parent=71 // pred_check_branch
          %1557 = sbr.rel (%p1555) target = $region76
        $region75: #{tpu_custom_call.1} parent=71 // pred_region
          %s1558 = sand.u32 %s271, 1
          %s1559 = scalar_lea.sflag [#allocation4], %s1558
          %s1560 = sand.u32 %s271, 1
          %s1561 = scalar_lea.vmem [#allocation3], %s1560
          %1562 = dma.done %s1559, 16
        $region76: #{tpu_custom_call.1} parent=71 // pred_fallthru
          _
      $region72: #{tpu_custom_call.1} parent=5 // pred_fallthru
        _
    $region6: #{tpu_custom_call.1} parent=1 // loop_footer
      %s25 = sadd.s32 1, %s21
    $region7: #{tpu_custom_call.1} parent=1 // loop_footer_branch
      %20 = sbr.rel target = $region3
    $region8: #{tpu_custom_call.1} parent=1 // loop_exit
      _
    %1563 = vsyncpa [#allocation4], 1
    %s1564 = scalar_lea.sflag [#allocation4], 1
    %1565 = vsyncpa %s1564, 1

</llo_original>
